<compile_context>
chip_gen: v7x
topology: tpu7x:2x2x1
jax: 0.10.0
libtpu: 0.0.40
codegen_flags: <defaults>
</compile_context>

<pallas_src>
import functools

import numpy as np

import jax
import jax.numpy as jnp
from jax import lax
from jax.experimental import pallas as pl
from jax.experimental.pallas import tpu as pltpu

K_MID = 16          # f_self / f_y 1x1 convs have a hard-coded 16 output channels
BN_EPS = 1e-5       # PyTorch BatchNorm2d default


# --------------------------------------------------------------------------
# Host-side constants
# --------------------------------------------------------------------------
def _make_view_perm(C, HW):
    """0/1 lane-interleave matrix: (wf @ perm)[c1, q*C+r] = wf[c1, r*M+q]."""
    M = HW // C
    rows = np.arange(HW)
    cols = (rows % M) * C + rows // M
    p = np.zeros((HW, HW), np.float32)
    p[rows, cols] = 1.0
    return jnp.asarray(p)


def _make_wsel(wup_eff, C):
    """wsel[r, c1, c2*C + r] = wup_eff[c1, c2] (zeros elsewhere) -> (C, C, C*C).

    Fuses the folded f_up weight with the C x C block-grid transpose of fout,
    so the kernel only needs whole-lane-block slices + tiny matmuls."""
    j = np.arange(C * C)
    mask = jnp.asarray((j[None, :] % C) == np.arange(C)[:, None])    # (C, C*C)
    wup_rep = wup_eff[:, j // C]                                     # (C, C*C)
    return jnp.where(mask[:, None, :], wup_rep[None, :, :], 0.0)


# --------------------------------------------------------------------------
# Fused Pallas kernel: projections + attention + permute/view + f_up + residual
# One grid step == one batch element.
# --------------------------------------------------------------------------
def _ccam_fused_kernel(scale_const, compute_dtype,
                       x_ref, y_ref, wself_ref, bself_ref, wy_ref, by_ref,
                       wsel_ref, bup_ref, perm_ref, o_ref):
    _, C, HW = x_ref.shape
    M = HW // C

    xb = x_ref[0]                                 # (C, HW) f32
    yb = y_ref[0]
    xc = xb.astype(compute_dtype)
    yc = yb.astype(compute_dtype)

    # f_self(x), f_y(y): folded 1x1 conv + BN -> matmul, then ReLU.  (K, HW)
    fself = jnp.maximum(
        jnp.dot(wself_ref[...], xc, preferred_element_type=jnp.float32)
        + bself_ref[...], 0.0)
    fy = jnp.maximum(
        jnp.dot(wy_ref[...], yc, preferred_element_type=jnp.float32)
        + by_ref[...], 0.0)

    # sim = fx @ fy^T  (contract over HW) -> (C, K)
    sim = lax.dot_general(xc, fy.astype(compute_dtype),
                          (((1,), (1,)), ((), ())),
                          preferred_element_type=jnp.float32)
    if scale_const is not None:
        sim = sim * scale_const

    # softmax over K, f32, exact division.
    m = jnp.max(sim, axis=-1, keepdims=True)
    e = jnp.exp(sim - m)
    p = e / jnp.sum(e, axis=-1, keepdims=True)

    # fout = softmax(sim) @ fself -> (C, HW)
    fout = jnp.dot(p.astype(compute_dtype), fself.astype(compute_dtype),
                   preferred_element_type=jnp.float32).astype(compute_dtype)

    # permute(0,2,1).contiguous().view + f_up, without sub-sublane slicing:
    #   fov[c2*C + r, q] = fout[r, c2*M + q]
    fov = jnp.concatenate(
        [fout[:, c2 * M:(c2 + 1) * M] for c2 in range(C)], axis=0)   # (C*C, M)

    #   wf[c1, r*M + q] = sum_c2 wup[c1, c2] * fov[c2*C + r, q]
    wf = jnp.concatenate(
        [jnp.dot(wsel_ref[r], fov, preferred_element_type=jnp.float32)
         for r in range(C)], axis=1)                                  # (C, HW)

    #   h[c1, q*C + r] = wf[c1, r*M + q]    (constant 0/1 interleave, MXU)
    h = jnp.dot(wf.astype(compute_dtype), perm_ref[...],
                preferred_element_type=jnp.float32)                   # (C, HW)

    # residual + folded f_up BN bias
    o_ref[0] = xb + h + bup_ref[...]


# --------------------------------------------------------------------------
# Wrapper
# --------------------------------------------------------------------------
def ccam_dec(x, y, folded_params, *, mid_channels, scale=False,
             compute_dtype=jnp.float32):
    """x, y: (B, C, H, W) float32.  Returns (B, C, H, W)."""
    B, C, H, W = x.shape
    HW = H * W
    if HW % C != 0:
        # TODO(synk): general relayout when C does not divide H*W.
        raise NotImplementedError("fused kernel assumes C divides H*W")

    wself, bself, wy, by, wup, bup = folded_params
    K = wself.shape[0]

    x3 = x.reshape(B, C, HW)
    y3 = y.reshape(B, C, HW)

    # Host-side constants / pre-casts (no in-kernel weight casts).
    perm = _make_view_perm(C, HW).astype(compute_dtype)       # 0/1: exact in bf16
    wsel = _make_wsel(wup, C).astype(compute_dtype)           # (C, C, C*C)
    wself_c = wself.astype(compute_dtype)
    wy_c = wy.astype(compute_dtype)

    scale_const = float(mid_channels) ** (-0.5) if scale else None

    data_spec = pl.BlockSpec((1, C, HW), lambda b: (b, 0, 0))

    def rep(shape):
        nd = len(shape)
        return pl.BlockSpec(shape, lambda b, nd=nd: (0,) * nd)

    itemsize = np.dtype(compute_dtype).itemsize
    # VMEM budget: double-buffered x/y/out blocks + resident params + headroom.
    blk_bytes = C * HW * 4
    param_bytes = (2 * K * C + C * C * C * C + HW * HW) * itemsize + (2 * K + C) * 4
    vmem_limit = int(min(max(2 * 3 * blk_bytes + 2 * param_bytes + (2 << 20),
                             4 << 20), 64 << 20))

    flops = B * (4 * K * C * HW          # f_self + f_y projections
                 + 2 * C * HW * K        # sim
                 + 2 * C * K * HW        # fout
                 + 2 * C * C * C * HW    # block-transpose-fused f_up matmuls
                 + 2 * C * HW * HW       # lane-interleave (0/1) matmul
                 + 5 * C * HW)           # bias / ReLU / residual
    bytes_accessed = (3 * B * C * HW * 4 + HW * HW * itemsize
                      + (2 * K * C + C * C * C * C) * itemsize + (2 * K + C) * 4)
    cost = pl.CostEstimate(flops=int(flops), transcendentals=int(B * C * K),
                           bytes_accessed=int(bytes_accessed))

    out = pl.pallas_call(
        functools.partial(_ccam_fused_kernel, scale_const, compute_dtype),
        out_shape=jax.ShapeDtypeStruct((B, C, HW), jnp.float32),
        grid_spec=pltpu.PrefetchScalarGridSpec(
            num_scalar_prefetch=0,
            grid=(B,),
            in_specs=[data_spec, data_spec,
                      rep((K, C)), rep((K, 1)),
                      rep((K, C)), rep((K, 1)),
                      rep((C, C, C * C)), rep((C, 1)),
                      rep((HW, HW))],
            out_specs=data_spec),
        compiler_params=pltpu.CompilerParams(
            dimension_semantics=("parallel",),
            vmem_limit_bytes=vmem_limit),
        cost_estimate=cost,
        # Residual: reuse x's buffer.  Each grid step reads/writes only its own
        # batch block, so the alias is hazard-free.
        input_output_aliases={0: 0},
    )(x3, y3, wself_c, bself, wy_c, by, wsel, bup, perm)

    return out.reshape(B, C, H, W)


# --------------------------------------------------------------------------
# Parameter construction (deterministic) + conv+BN folding
# --------------------------------------------------------------------------
def fold_conv_bn(conv_w, gamma, beta, mean, var, eps=BN_EPS):
    """Fold 1x1 conv (out,in) + eval-mode BN into an affine matmul."""
    s = gamma / jnp.sqrt(var + eps)
    w_eff = conv_w * s[:, None]
    b_eff = beta - s * mean
    return w_eff.astype(jnp.float32), b_eff[:, None].astype(jnp.float32)


def make_params(key, xin_channels):
    ks = jax.random.split(key, 15)

    def bn_params(k0, k1, k2, k3, ch):
        gamma = 0.5 + jax.random.uniform(k0, (ch,), jnp.float32)
        beta = 0.1 * jax.random.normal(k1, (ch,), jnp.float32)
        mean = 0.1 * jax.random.normal(k2, (ch,), jnp.float32)
        var = 0.5 + jax.random.uniform(k3, (ch,), jnp.float32)
        return gamma, beta, mean, var

    w_self = 0.2 * jax.random.normal(ks[0], (K_MID, xin_channels), jnp.float32)
    bn_self = bn_params(ks[1], ks[2], ks[3], ks[4], K_MID)

    w_y = 0.2 * jax.random.normal(ks[5], (K_MID, xin_channels), jnp.float32)
    bn_y = bn_params(ks[6], ks[7], ks[8], ks[9], K_MID)

    # f_up: Conv2d(mid_channels, xin_channels, 1); the forward requires
    # mid_channels == xin_channels for shapes to line up.
    w_up = 0.2 * jax.random.normal(ks[10], (xin_channels, xin_channels),
                                   jnp.float32)
    bn_up = bn_params(ks[11], ks[12], ks[13], ks[14], xin_channels)

    raw = dict(w_self=w_self, bn_self=bn_self, w_y=w_y, bn_y=bn_y,
               w_up=w_up, bn_up=bn_up)
    folded = (*fold_conv_bn(w_self, *bn_self),
              *fold_conv_bn(w_y, *bn_y),
              *fold_conv_bn(w_up, *bn_up))
    return raw, folded


# --------------------------------------------------------------------------
# Pure-JAX reference mirroring the PyTorch forward exactly
# --------------------------------------------------------------------------
def reference(x, y, raw, *, mid_channels, scale=False):
    B, C, H, W = x.shape

    def conv_bn(inp, w, bn, relu):
        g, b, m, v = bn
        z = jnp.einsum('oc,bchw->bohw', w, inp)
        z = (g[None, :, None, None] * (z - m[None, :, None, None])
             / jnp.sqrt(v[None, :, None, None] + BN_EPS)
             + b[None, :, None, None])
        return jnp.maximum(z, 0.0) if relu else z

    fself = conv_bn(x, raw['w_self'], raw['bn_self'], True)
    K = fself.shape[1]
    fself = fself.reshape(B, K, -1)
    fx = x.reshape(B, C, -1)
    fy = conv_bn(y, raw['w_y'], raw['bn_y'], True).reshape(B, K, -1)
    fy = jnp.transpose(fy, (0, 2, 1))
    sim = jnp.einsum('bcn,bnk->bck', fx, fy)
    if scale:
        sim = sim * (mid_channels ** -0.5)
    p = jax.nn.softmax(sim, axis=-1)
    fout = jnp.einsum('bck,bkn->bcn', p, fself)
    fout = jnp.transpose(fout, (0, 2, 1)).reshape(B, C, H, W)
    out = conv_bn(fout, raw['w_up'], raw['bn_up'], False)
    return x + out


# --------------------------------------------------------------------------
if __name__ == "__main__":
    key = jax.random.PRNGKey(0)
    k_x, k_y, k_p = jax.random.split(key, 3)

    B, C, H, W = 2, 4, 16, 16       # xin_channels = 4
    mid_channels = C                # must equal xin_channels for f_up to work

    x = jax.random.normal(k_x, (B, C, H, W), jnp.float32)
    y = jax.random.normal(k_y, (B, C, H, W), jnp.float32)

    raw, folded = make_params(k_p, C)

    fn = jax.jit(functools.partial(ccam_dec, mid_channels=mid_channels,
                                   scale=False))
    out = jax.block_until_ready(fn(x, y, folded))

    ref = reference(x, y, raw, mid_channels=mid_channels, scale=False)
    assert out.shape == (B, C, H, W)
    max_err = float(jnp.max(jnp.abs(out - ref)))
    assert jnp.allclose(out, ref, atol=2e-3, rtol=2e-3), max_err
    print("KERNEL_OK")
</pallas_src>

<mosaic_0001>
module attributes {stable_mosaic.version = 11 : i64} {
  func.func @_ccam_fused_kernel(%arg0: i32, %arg1: memref<1x4x256xf32, #tpu.memory_space<vmem>>, %arg2: memref<1x4x256xf32, #tpu.memory_space<vmem>>, %arg3: memref<16x4xf32, #tpu.memory_space<vmem>>, %arg4: memref<16x1xf32, #tpu.memory_space<vmem>>, %arg5: memref<16x4xf32, #tpu.memory_space<vmem>>, %arg6: memref<16x1xf32, #tpu.memory_space<vmem>>, %arg7: memref<4x4x16xf32, #tpu.memory_space<vmem>>, %arg8: memref<4x1xf32, #tpu.memory_space<vmem>>, %arg9: memref<256x256xf32, #tpu.memory_space<vmem>>, %arg10: memref<1x4x256xf32, #tpu.memory_space<vmem>>) attributes {dimension_semantics = [#tpu.dimension_semantics<parallel>], iteration_bounds = array<i64: 2>, scalar_prefetch = 0 : i64, scratch_operands = 0 : i64, tpu.core_type = #tpu.core_type<tc>, window_params = [{transform_indices = @transform_0, window_bounds = array<i64: 1, 4, 256>}, {transform_indices = @transform_1, window_bounds = array<i64: 1, 4, 256>}, {pipeline_mode = #tpu.pipeline_mode<synchronous>, transform_indices = @transform_2, window_bounds = array<i64: 16, 4>}, {pipeline_mode = #tpu.pipeline_mode<synchronous>, transform_indices = @transform_3, window_bounds = array<i64: 16, 1>}, {pipeline_mode = #tpu.pipeline_mode<synchronous>, transform_indices = @transform_4, window_bounds = array<i64: 16, 4>}, {pipeline_mode = #tpu.pipeline_mode<synchronous>, transform_indices = @transform_5, window_bounds = array<i64: 16, 1>}, {pipeline_mode = #tpu.pipeline_mode<synchronous>, transform_indices = @transform_6, window_bounds = array<i64: 4, 4, 16>}, {pipeline_mode = #tpu.pipeline_mode<synchronous>, transform_indices = @transform_7, window_bounds = array<i64: 4, 1>}, {pipeline_mode = #tpu.pipeline_mode<synchronous>, transform_indices = @transform_8, window_bounds = array<i64: 256, 256>}, {transform_indices = @transform_9, window_bounds = array<i64: 1, 4, 256>}]} {
    %c0 = arith.constant 0 : index
    %c0_0 = arith.constant 0 : index
    %c0_1 = arith.constant 0 : index
    %0 = vector.load %arg1[%c0, %c0_0, %c0_1] : memref<1x4x256xf32, #tpu.memory_space<vmem>>, vector<1x4x256xf32>
    %1 = vector.shape_cast %0 : vector<1x4x256xf32> to vector<4x256xf32>
    %c0_2 = arith.constant 0 : index
    %c0_3 = arith.constant 0 : index
    %c0_4 = arith.constant 0 : index
    %2 = vector.load %arg2[%c0_2, %c0_3, %c0_4] : memref<1x4x256xf32, #tpu.memory_space<vmem>>, vector<1x4x256xf32>
    %3 = vector.shape_cast %2 : vector<1x4x256xf32> to vector<4x256xf32>
    %c0_5 = arith.constant 0 : index
    %c0_6 = arith.constant 0 : index
    %4 = vector.load %arg3[%c0_5, %c0_6] : memref<16x4xf32, #tpu.memory_space<vmem>>, vector<16x4xf32>
    %cst = arith.constant dense<0.000000e+00> : vector<16x256xf32>
    %5 = tpu.matmul %4, %1, %cst {dimension_numbers = #tpu.dot_dimension_numbers<[1], [0], [0], [1], [0, 0, 1, 1], [], []>} : vector<16x4xf32>, vector<4x256xf32>, vector<16x256xf32> -> vector<16x256xf32>
    %c0_7 = arith.constant 0 : index
    %c0_8 = arith.constant 0 : index
    %6 = vector.load %arg4[%c0_7, %c0_8] : memref<16x1xf32, #tpu.memory_space<vmem>>, vector<16x1xf32>
    %7 = vector.broadcast %6 : vector<16x1xf32> to vector<16x256xf32>
    %8 = arith.addf %5, %7 : vector<16x256xf32>
    %cst_9 = arith.constant 0.000000e+00 : f32
    %9 = vector.broadcast %cst_9 : f32 to vector<16x256xf32>
    %10 = arith.maximumf %8, %9 : vector<16x256xf32>
    %c0_10 = arith.constant 0 : index
    %c0_11 = arith.constant 0 : index
    %11 = vector.load %arg5[%c0_10, %c0_11] : memref<16x4xf32, #tpu.memory_space<vmem>>, vector<16x4xf32>
    %cst_12 = arith.constant dense<0.000000e+00> : vector<16x256xf32>
    %12 = tpu.matmul %11, %3, %cst_12 {dimension_numbers = #tpu.dot_dimension_numbers<[1], [0], [0], [1], [0, 0, 1, 1], [], []>} : vector<16x4xf32>, vector<4x256xf32>, vector<16x256xf32> -> vector<16x256xf32>
    %c0_13 = arith.constant 0 : index
    %c0_14 = arith.constant 0 : index
    %13 = vector.load %arg6[%c0_13, %c0_14] : memref<16x1xf32, #tpu.memory_space<vmem>>, vector<16x1xf32>
    %14 = vector.broadcast %13 : vector<16x1xf32> to vector<16x256xf32>
    %15 = arith.addf %12, %14 : vector<16x256xf32>
    %cst_15 = arith.constant 0.000000e+00 : f32
    %16 = vector.broadcast %cst_15 : f32 to vector<16x256xf32>
    %17 = arith.maximumf %15, %16 : vector<16x256xf32>
    %cst_16 = arith.constant dense<0.000000e+00> : vector<4x16xf32>
    %18 = tpu.matmul %1, %17, %cst_16 {dimension_numbers = #tpu.dot_dimension_numbers<[1], [1], [0], [0], [0, 0, 1, 0], [], []>} : vector<4x256xf32>, vector<16x256xf32>, vector<4x16xf32> -> vector<4x16xf32>
    %cst_17 = arith.constant dense<0xFF800000> : vector<4xf32>
    %19 = vector.multi_reduction <maximumf>, %18, %cst_17 [1] : vector<4x16xf32> to vector<4xf32>
    %20 = vector.shape_cast %19 : vector<4xf32> to vector<4x1xf32>
    %21 = vector.broadcast %20 : vector<4x1xf32> to vector<4x16xf32>
    %22 = arith.subf %18, %21 : vector<4x16xf32>
    %23 = math.exp %22 : vector<4x16xf32>
    %cst_18 = arith.constant dense<0.000000e+00> : vector<4xf32>
    %24 = vector.multi_reduction <add>, %23, %cst_18 [1] : vector<4x16xf32> to vector<4xf32>
    %25 = vector.shape_cast %24 : vector<4xf32> to vector<4x1xf32>
    %26 = vector.broadcast %25 : vector<4x1xf32> to vector<4x16xf32>
    %27 = arith.divf %23, %26 : vector<4x16xf32>
    %cst_19 = arith.constant dense<0.000000e+00> : vector<4x256xf32>
    %28 = tpu.matmul %27, %10, %cst_19 {dimension_numbers = #tpu.dot_dimension_numbers<[1], [0], [0], [1], [0, 0, 1, 1], [], []>} : vector<4x16xf32>, vector<16x256xf32>, vector<4x256xf32> -> vector<4x256xf32>
    %29 = vector.extract_strided_slice %28 {offsets = [0, 0], sizes = [4, 64], strides = [1, 1]} : vector<4x256xf32> to vector<4x64xf32>
    %30 = vector.extract_strided_slice %28 {offsets = [0, 64], sizes = [4, 64], strides = [1, 1]} : vector<4x256xf32> to vector<4x64xf32>
    %31 = vector.extract_strided_slice %28 {offsets = [0, 128], sizes = [4, 64], strides = [1, 1]} : vector<4x256xf32> to vector<4x64xf32>
    %32 = vector.extract_strided_slice %28 {offsets = [0, 192], sizes = [4, 64], strides = [1, 1]} : vector<4x256xf32> to vector<4x64xf32>
    %33 = tpu.concatenate %29, %30, %31, %32 in 0 : vector<4x64xf32>, vector<4x64xf32>, vector<4x64xf32>, vector<4x64xf32> -> vector<16x64xf32>
    %c0_20 = arith.constant 0 : index
    %c0_21 = arith.constant 0 : index
    %c0_22 = arith.constant 0 : index
    %34 = vector.load %arg7[%c0_20, %c0_21, %c0_22] : memref<4x4x16xf32, #tpu.memory_space<vmem>>, vector<1x4x16xf32>
    %35 = vector.shape_cast %34 : vector<1x4x16xf32> to vector<4x16xf32>
    %cst_23 = arith.constant dense<0.000000e+00> : vector<4x64xf32>
    %36 = tpu.matmul %35, %33, %cst_23 {dimension_numbers = #tpu.dot_dimension_numbers<[1], [0], [0], [1], [0, 0, 1, 1], [], []>} : vector<4x16xf32>, vector<16x64xf32>, vector<4x64xf32> -> vector<4x64xf32>
    %c1 = arith.constant 1 : index
    %c0_24 = arith.constant 0 : index
    %c0_25 = arith.constant 0 : index
    %37 = vector.load %arg7[%c1, %c0_24, %c0_25] : memref<4x4x16xf32, #tpu.memory_space<vmem>>, vector<1x4x16xf32>
    %38 = vector.shape_cast %37 : vector<1x4x16xf32> to vector<4x16xf32>
    %cst_26 = arith.constant dense<0.000000e+00> : vector<4x64xf32>
    %39 = tpu.matmul %38, %33, %cst_26 {dimension_numbers = #tpu.dot_dimension_numbers<[1], [0], [0], [1], [0, 0, 1, 1], [], []>} : vector<4x16xf32>, vector<16x64xf32>, vector<4x64xf32> -> vector<4x64xf32>
    %c2 = arith.constant 2 : index
    %c0_27 = arith.constant 0 : index
    %c0_28 = arith.constant 0 : index
    %40 = vector.load %arg7[%c2, %c0_27, %c0_28] : memref<4x4x16xf32, #tpu.memory_space<vmem>>, vector<1x4x16xf32>
    %41 = vector.shape_cast %40 : vector<1x4x16xf32> to vector<4x16xf32>
    %cst_29 = arith.constant dense<0.000000e+00> : vector<4x64xf32>
    %42 = tpu.matmul %41, %33, %cst_29 {dimension_numbers = #tpu.dot_dimension_numbers<[1], [0], [0], [1], [0, 0, 1, 1], [], []>} : vector<4x16xf32>, vector<16x64xf32>, vector<4x64xf32> -> vector<4x64xf32>
    %c3 = arith.constant 3 : index
    %c0_30 = arith.constant 0 : index
    %c0_31 = arith.constant 0 : index
    %43 = vector.load %arg7[%c3, %c0_30, %c0_31] : memref<4x4x16xf32, #tpu.memory_space<vmem>>, vector<1x4x16xf32>
    %44 = vector.shape_cast %43 : vector<1x4x16xf32> to vector<4x16xf32>
    %cst_32 = arith.constant dense<0.000000e+00> : vector<4x64xf32>
    %45 = tpu.matmul %44, %33, %cst_32 {dimension_numbers = #tpu.dot_dimension_numbers<[1], [0], [0], [1], [0, 0, 1, 1], [], []>} : vector<4x16xf32>, vector<16x64xf32>, vector<4x64xf32> -> vector<4x64xf32>
    %46 = tpu.concatenate %36, %39, %42, %45 in 1 : vector<4x64xf32>, vector<4x64xf32>, vector<4x64xf32>, vector<4x64xf32> -> vector<4x256xf32>
    %c0_33 = arith.constant 0 : index
    %c0_34 = arith.constant 0 : index
    %47 = vector.load %arg9[%c0_33, %c0_34] : memref<256x256xf32, #tpu.memory_space<vmem>>, vector<256x256xf32>
    %cst_35 = arith.constant dense<0.000000e+00> : vector<4x256xf32>
    %48 = tpu.matmul %46, %47, %cst_35 {dimension_numbers = #tpu.dot_dimension_numbers<[1], [0], [0], [1], [0, 0, 1, 1], [], []>} : vector<4x256xf32>, vector<256x256xf32>, vector<4x256xf32> -> vector<4x256xf32>
    %49 = arith.addf %1, %48 : vector<4x256xf32>
    %c0_36 = arith.constant 0 : index
    %c0_37 = arith.constant 0 : index
    %50 = vector.load %arg8[%c0_36, %c0_37] : memref<4x1xf32, #tpu.memory_space<vmem>>, vector<4x1xf32>
    %51 = vector.broadcast %50 : vector<4x1xf32> to vector<4x256xf32>
    %52 = arith.addf %49, %51 : vector<4x256xf32>
    %c0_38 = arith.constant 0 : index
    %c0_39 = arith.constant 0 : index
    %c0_40 = arith.constant 0 : index
    %53 = vector.load %arg10[%c0_38, %c0_39, %c0_40] : memref<1x4x256xf32, #tpu.memory_space<vmem>>, vector<1x4x256xf32>
    %54 = vector.shape_cast %53 : vector<1x4x256xf32> to vector<4x256xf32>
    %55 = vector.shape_cast %52 : vector<4x256xf32> to vector<1x4x256xf32>
    tpu.vector_store %arg10[%c0_38, %c0_39, %c0_40], %55 {strides = array<i32>} : memref<1x4x256xf32, #tpu.memory_space<vmem>>, vector<1x4x256xf32>,
    return
  }
  func.func @transform_0(%arg0: i32) -> (i32, i32, i32) {
    %c0_i32 = arith.constant 0 : i32
    %c0_i32_0 = arith.constant 0 : i32
    %c0_i32_1 = arith.constant 0 : i32
    return %arg0, %c0_i32, %c0_i32_0 : i32, i32, i32
  }
  func.func @transform_1(%arg0: i32) -> (i32, i32, i32) {
    %c0_i32 = arith.constant 0 : i32
    %c0_i32_0 = arith.constant 0 : i32
    %c0_i32_1 = arith.constant 0 : i32
    return %arg0, %c0_i32, %c0_i32_0 : i32, i32, i32
  }
  func.func @transform_2(%arg0: i32) -> (i32, i32) {
    %c0_i32 = arith.constant 0 : i32
    %c0_i32_0 = arith.constant 0 : i32
    %c0_i32_1 = arith.constant 0 : i32
    return %c0_i32, %c0_i32_0 : i32, i32
  }
  func.func @transform_3(%arg0: i32) -> (i32, i32) {
    %c0_i32 = arith.constant 0 : i32
    %c0_i32_0 = arith.constant 0 : i32
    %c0_i32_1 = arith.constant 0 : i32
    return %c0_i32, %c0_i32_0 : i32, i32
  }
  func.func @transform_4(%arg0: i32) -> (i32, i32) {
    %c0_i32 = arith.constant 0 : i32
    %c0_i32_0 = arith.constant 0 : i32
    %c0_i32_1 = arith.constant 0 : i32
    return %c0_i32, %c0_i32_0 : i32, i32
  }
  func.func @transform_5(%arg0: i32) -> (i32, i32) {
    %c0_i32 = arith.constant 0 : i32
    %c0_i32_0 = arith.constant 0 : i32
    %c0_i32_1 = arith.constant 0 : i32
    return %c0_i32, %c0_i32_0 : i32, i32
  }
  func.func @transform_6(%arg0: i32) -> (i32, i32, i32) {
    %c0_i32 = arith.constant 0 : i32
    %c0_i32_0 = arith.constant 0 : i32
    %c0_i32_1 = arith.constant 0 : i32
    %c0_i32_2 = arith.constant 0 : i32
    return %c0_i32, %c0_i32_0, %c0_i32_1 : i32, i32, i32
  }
  func.func @transform_7(%arg0: i32) -> (i32, i32) {
    %c0_i32 = arith.constant 0 : i32
    %c0_i32_0 = arith.constant 0 : i32
    %c0_i32_1 = arith.constant 0 : i32
    return %c0_i32, %c0_i32_0 : i32, i32
  }
  func.func @transform_8(%arg0: i32) -> (i32, i32) {
    %c0_i32 = arith.constant 0 : i32
    %c0_i32_0 = arith.constant 0 : i32
    %c0_i32_1 = arith.constant 0 : i32
    return %c0_i32, %c0_i32_0 : i32, i32
  }
  func.func @transform_9(%arg0: i32) -> (i32, i32, i32) {
    %c0_i32 = arith.constant 0 : i32
    %c0_i32_0 = arith.constant 0 : i32
    %c0_i32_1 = arith.constant 0 : i32
    return %arg0, %c0_i32, %c0_i32_0 : i32, i32, i32
  }
}

</mosaic_0001>

<llo_original>
// kernel: ccam_dec.1
$region0: #{ccam_dec.1}
  #allocation0 [shape = 'u32[]', space=smem, size = 0x4, offset = 0x4, fixed_abs, tag = 'smem constant byte address 0x4 - core index']
  #allocation1 [shape = 'u32[144,128]{1,0:T(1,128)}', space=vmem, size = 0x12000, scoped, tag = 'internal scratch']
  %s0 = inlined_call_operand.vmem [shape: f32[2,4,256], index: 0, kind: input, shape index: {}, may-alias: {0,9}]
  %s1 = inlined_call_operand.vmem [shape: f32[2,4,256], index: 1, kind: input, shape index: {}]
  %s2 = inlined_call_operand.vmem [shape: f32[16,4], index: 2, kind: input, shape index: {}]
  %s3 = inlined_call_operand.vmem [shape: f32[16,1], index: 3, kind: input, shape index: {}]
  %s4 = inlined_call_operand.vmem [shape: f32[16,4], index: 4, kind: input, shape index: {}]
  %s5 = inlined_call_operand.vmem [shape: f32[16,1], index: 5, kind: input, shape index: {}]
  %s6 = inlined_call_operand.vmem [shape: f32[4,4,16], index: 6, kind: input, shape index: {}]
  %s7 = inlined_call_operand.vmem [shape: f32[4,1], index: 7, kind: input, shape index: {}]
  %s8 = inlined_call_operand.hbm [shape: f32[256,256], index: 8, kind: input, shape index: {}]
  %s9 = inlined_call_operand.vmem [shape: f32[2,4,256], index: 9, kind: output, shape index: {}, may-alias: {0,9}]
  %s10 = sld [smem:[#allocation0]]
  $region73: #{ccam_dec.1} parent=0
    _
  %s12 = ssub.s32 1, %s10
  %s13 = scalar_select 0, %s12, %s10
  $region1: #{ccam_dec.1} parent=0
    #allocation2 [shape = 'u8[262144]{0}', space=vmem, size = 0x40000, scoped, tag = 'input window, operand 8, single buffered']
    #allocation3 [shape = 's32[2]{0}', space=sflag, size = 0x8, scoped, tag = 'scoped memory for ccam_dec.1']
    %14 = vsyncpa [#allocation3], 0
    loop: start=0, step=1, limit=4
    $region2: #{ccam_dec.1} parent=1 // loop_pre_header
      _
    $region3: #{ccam_dec.1} parent=1 // loop_header
      %s16 = sphi 0, %s20
      %p17 = scmp.ge.s32.totalorder %s16, 4
      %s26 = sphi 0, %s28
      %s29 = sphi 0, %s26
      %s30 = sphi 0, %s29
      %s46 = sphi 0, %s30
      %s52 = sphi 0, %s54
      %s55 = sphi 0, %s52
      %s56 = sphi 0, %s55
      %s72 = sphi 0, %s56
      %s76 = sphi 0, %s76
      %s78 = sphi 0, %s76
      %s79 = sphi 0, %s78
      %s93 = sphi 0, %s79
      %s97 = sphi 0, %s97
      %s99 = sphi 0, %s97
      %s100 = sphi 0, %s99
      %s114 = sphi 0, %s100
      %s118 = sphi 0, %s118
      %s120 = sphi 0, %s118
      %s121 = sphi 0, %s120
      %s135 = sphi 0, %s121
      %s139 = sphi 0, %s139
      %s141 = sphi 0, %s139
      %s142 = sphi 0, %s141
      %s156 = sphi 0, %s142
      %s160 = sphi 0, %s160
      %s162 = sphi 0, %s160
      %s163 = sphi 0, %s162
      %s177 = sphi 0, %s163
      %s181 = sphi 0, %s181
      %s183 = sphi 0, %s181
      %s184 = sphi 0, %s183
      %s198 = sphi 0, %s184
      %s202 = sphi 0, %s202
      %s204 = sphi 0, %s202
      %s205 = sphi 0, %s204
      %s219 = sphi 0, %s205
      %s225 = sphi 0, %s227
      %s228 = sphi 0, %s225
      %s229 = sphi 0, %s228
      %s245 = sphi 0, %s229
    $region4: #{ccam_dec.1} parent=1 // loop_header_branch
      %19 = sbr.rel (%p17) target = $region8
    $region5: #{ccam_dec.1} parent=1 // loop_body
      %s21 = ssub.s32 %s16, 1
      %s22 = ssub.s32 %s16, 2
      %s23 = sadd.s32 %s16, 1
      %s24 = ssub.s32 %s16, %s23
      %p25 = scmp.eq.s32.totalorder %s24, 0
      %s27 = sadd.s32 %s26, 1
      %s28 = scalar_select %p25, %s26, %s27
      %p31 = pneg %p25
      %p32 = scmp.eq.s32.totalorder %s16, 1
      %p33 = por %p31, %p32
      %p34 = scmp.ne.s32.totalorder %s26, %s29
      %p35 = scmp.eq.s32.totalorder %s16, 0
      %p36 = por %p34, %p35
      %p37 = scmp.ne.s32.totalorder %s26, %s29
      %p38 = scmp.eq.s32.totalorder %s21, 1
      %p39 = por %p37, %p38
      %p40 = scmp.ne.s32.totalorder %s29, %s30
      %p41 = scmp.eq.s32.totalorder %s21, 0
      %p42 = por %p40, %p41
      %p43 = scmp.ne.s32.totalorder %s29, %s30
      %p44 = scmp.eq.s32.totalorder %s22, 1
      %p45 = por %p43, %p44
      %p47 = scmp.ne.s32.totalorder %s30, %s46
      %p48 = scmp.eq.s32.totalorder %s22, 0
      %p49 = por %p47, %p48
      %s50 = ssub.s32 %s16, %s23
      %p51 = scmp.eq.s32.totalorder %s50, 0
      %s53 = sadd.s32 %s52, 1
      %s54 = scalar_select %p51, %s52, %s53
      %p57 = pneg %p51
      %p58 = scmp.eq.s32.totalorder %s16, 1
      %p59 = por %p57, %p58
      %p60 = scmp.ne.s32.totalorder %s52, %s55
      %p61 = scmp.eq.s32.totalorder %s16, 0
      %p62 = por %p60, %p61
      %p63 = scmp.ne.s32.totalorder %s52, %s55
      %p64 = scmp.eq.s32.totalorder %s21, 1
      %p65 = por %p63, %p64
      %p66 = scmp.ne.s32.totalorder %s55, %s56
      %p67 = scmp.eq.s32.totalorder %s21, 0
      %p68 = por %p66, %p67
      %p69 = scmp.ne.s32.totalorder %s55, %s56
      %p70 = scmp.eq.s32.totalorder %s22, 1
      %p71 = por %p69, %p70
      %p73 = scmp.ne.s32.totalorder %s56, %s72
      %p74 = scmp.eq.s32.totalorder %s22, 0
      %p75 = por %p73, %p74
      %s77 = sadd.s32 %s76, 1
      %p80 = scmp.eq.s32.totalorder %s16, 1
      %p81 = scmp.ne.s32.totalorder %s76, %s78
      %p82 = scmp.eq.s32.totalorder %s16, 0
      %p83 = por %p81, %p82
      %p84 = scmp.ne.s32.totalorder %s76, %s78
      %p85 = scmp.eq.s32.totalorder %s21, 1
      %p86 = por %p84, %p85
      %p87 = scmp.ne.s32.totalorder %s78, %s79
      %p88 = scmp.eq.s32.totalorder %s21, 0
      %p89 = por %p87, %p88
      %p90 = scmp.ne.s32.totalorder %s78, %s79
      %p91 = scmp.eq.s32.totalorder %s22, 1
      %p92 = por %p90, %p91
      %p94 = scmp.ne.s32.totalorder %s79, %s93
      %p95 = scmp.eq.s32.totalorder %s22, 0
      %p96 = por %p94, %p95
      %s98 = sadd.s32 %s97, 1
      %p101 = scmp.eq.s32.totalorder %s16, 1
      %p102 = scmp.ne.s32.totalorder %s97, %s99
      %p103 = scmp.eq.s32.totalorder %s16, 0
      %p104 = por %p102, %p103
      %p105 = scmp.ne.s32.totalorder %s97, %s99
      %p106 = scmp.eq.s32.totalorder %s21, 1
      %p107 = por %p105, %p106
      %p108 = scmp.ne.s32.totalorder %s99, %s100
      %p109 = scmp.eq.s32.totalorder %s21, 0
      %p110 = por %p108, %p109
      %p111 = scmp.ne.s32.totalorder %s99, %s100
      %p112 = scmp.eq.s32.totalorder %s22, 1
      %p113 = por %p111, %p112
      %p115 = scmp.ne.s32.totalorder %s100, %s114
      %p116 = scmp.eq.s32.totalorder %s22, 0
      %p117 = por %p115, %p116
      %s119 = sadd.s32 %s118, 1
      %p122 = scmp.eq.s32.totalorder %s16, 1
      %p123 = scmp.ne.s32.totalorder %s118, %s120
      %p124 = scmp.eq.s32.totalorder %s16, 0
      %p125 = por %p123, %p124
      %p126 = scmp.ne.s32.totalorder %s118, %s120
      %p127 = scmp.eq.s32.totalorder %s21, 1
      %p128 = por %p126, %p127
      %p129 = scmp.ne.s32.totalorder %s120, %s121
      %p130 = scmp.eq.s32.totalorder %s21, 0
      %p131 = por %p129, %p130
      %p132 = scmp.ne.s32.totalorder %s120, %s121
      %p133 = scmp.eq.s32.totalorder %s22, 1
      %p134 = por %p132, %p133
      %p136 = scmp.ne.s32.totalorder %s121, %s135
      %p137 = scmp.eq.s32.totalorder %s22, 0
      %p138 = por %p136, %p137
      %s140 = sadd.s32 %s139, 1
      %p143 = scmp.eq.s32.totalorder %s16, 1
      %p144 = scmp.ne.s32.totalorder %s139, %s141
      %p145 = scmp.eq.s32.totalorder %s16, 0
      %p146 = por %p144, %p145
      %p147 = scmp.ne.s32.totalorder %s139, %s141
      %p148 = scmp.eq.s32.totalorder %s21, 1
      %p149 = por %p147, %p148
      %p150 = scmp.ne.s32.totalorder %s141, %s142
      %p151 = scmp.eq.s32.totalorder %s21, 0
      %p152 = por %p150, %p151
      %p153 = scmp.ne.s32.totalorder %s141, %s142
      %p154 = scmp.eq.s32.totalorder %s22, 1
      %p155 = por %p153, %p154
      %p157 = scmp.ne.s32.totalorder %s142, %s156
      %p158 = scmp.eq.s32.totalorder %s22, 0
      %p159 = por %p157, %p158
      %s161 = sadd.s32 %s160, 1
      %p164 = scmp.eq.s32.totalorder %s16, 1
      %p165 = scmp.ne.s32.totalorder %s160, %s162
      %p166 = scmp.eq.s32.totalorder %s16, 0
      %p167 = por %p165, %p166
      %p168 = scmp.ne.s32.totalorder %s160, %s162
      %p169 = scmp.eq.s32.totalorder %s21, 1
      %p170 = por %p168, %p169
      %p171 = scmp.ne.s32.totalorder %s162, %s163
      %p172 = scmp.eq.s32.totalorder %s21, 0
      %p173 = por %p171, %p172
      %p174 = scmp.ne.s32.totalorder %s162, %s163
      %p175 = scmp.eq.s32.totalorder %s22, 1
      %p176 = por %p174, %p175
      %p178 = scmp.ne.s32.totalorder %s163, %s177
      %p179 = scmp.eq.s32.totalorder %s22, 0
      %p180 = por %p178, %p179
      %s182 = sadd.s32 %s181, 1
      %p185 = scmp.eq.s32.totalorder %s16, 1
      %p186 = scmp.ne.s32.totalorder %s181, %s183
      %p187 = scmp.eq.s32.totalorder %s16, 0
      %p188 = por %p186, %p187
      %p189 = scmp.ne.s32.totalorder %s181, %s183
      %p190 = scmp.eq.s32.totalorder %s21, 1
      %p191 = por %p189, %p190
      %p192 = scmp.ne.s32.totalorder %s183, %s184
      %p193 = scmp.eq.s32.totalorder %s21, 0
      %p194 = por %p192, %p193
      %p195 = scmp.ne.s32.totalorder %s183, %s184
      %p196 = scmp.eq.s32.totalorder %s22, 1
      %p197 = por %p195, %p196
      %p199 = scmp.ne.s32.totalorder %s184, %s198
      %p200 = scmp.eq.s32.totalorder %s22, 0
      %p201 = por %p199, %p200
      %s203 = sadd.s32 %s202, 1
      %p206 = scmp.eq.s32.totalorder %s16, 1
      %p207 = scmp.ne.s32.totalorder %s202, %s204
      %p208 = scmp.eq.s32.totalorder %s16, 0
      %p209 = por %p207, %p208
      %p210 = scmp.ne.s32.totalorder %s202, %s204
      %p211 = scmp.eq.s32.totalorder %s21, 1
      %p212 = por %p210, %p211
      %p213 = scmp.ne.s32.totalorder %s204, %s205
      %p214 = scmp.eq.s32.totalorder %s21, 0
      %p215 = por %p213, %p214
      %p216 = scmp.ne.s32.totalorder %s204, %s205
      %p217 = scmp.eq.s32.totalorder %s22, 1
      %p218 = por %p216, %p217
      %p220 = scmp.ne.s32.totalorder %s205, %s219
      %p221 = scmp.eq.s32.totalorder %s22, 0
      %p222 = por %p220, %p221
      %s223 = ssub.s32 %s16, %s23
      %p224 = scmp.eq.s32.totalorder %s223, 0
      %s226 = sadd.s32 %s225, 1
      %s227 = scalar_select %p224, %s225, %s226
      %p230 = pneg %p224
      %p231 = scmp.eq.s32.totalorder %s16, 1
      %p232 = por %p230, %p231
      %p233 = scmp.ne.s32.totalorder %s225, %s228
      %p234 = scmp.eq.s32.totalorder %s16, 0
      %p235 = por %p233, %p234
      %p236 = scmp.ne.s32.totalorder %s225, %s228
      %p237 = scmp.eq.s32.totalorder %s21, 1
      %p238 = por %p236, %p237
      %p239 = scmp.ne.s32.totalorder %s228, %s229
      %p240 = scmp.eq.s32.totalorder %s21, 0
      %p241 = por %p239, %p240
      %p242 = scmp.ne.s32.totalorder %s228, %s229
      %p243 = scmp.eq.s32.totalorder %s22, 1
      %p244 = por %p242, %p243
      %p246 = scmp.ne.s32.totalorder %s229, %s245
      %p247 = scmp.eq.s32.totalorder %s22, 0
      %p248 = por %p246, %p247
      %p249 = scmp.le.s32.totalorder 1, %s16
      %p250 = scmp.lt.s32.totalorder %s16, 3
      %p251 = pnand %p249, %p250
      %p252 = pneg %p251
      // Predicated region
      $region9: #{ccam_dec.1} parent=5 // pred_check
        _
      $region10: #{ccam_dec.1} parent=5 // pred_check_branch
        %254 = sbr.rel (%p251) target = $region12
      $region11: #{ccam_dec.1} parent=5 // pred_region
        %s255 = ssub.s32 %s16, 1
        // Predicated region
        $region13: #{ccam_dec.1} parent=11 // pred_check
          %p256 = pneg %p89
        $region14: #{ccam_dec.1} parent=11 // pred_check_branch
          %258 = sbr.rel (%p256) target = $region16
        $region15: #{ccam_dec.1} parent=11 // pred_region
          _
        $region16: #{ccam_dec.1} parent=11 // pred_fallthru
          _
        // Predicated region
        $region17: #{ccam_dec.1} parent=11 // pred_check
          %p259 = pneg %p110
        $region18: #{ccam_dec.1} parent=11 // pred_check_branch
          %261 = sbr.rel (%p259) target = $region20
        $region19: #{ccam_dec.1} parent=11 // pred_region
          _
        $region20: #{ccam_dec.1} parent=11 // pred_fallthru
          _
        // Predicated region
        $region21: #{ccam_dec.1} parent=11 // pred_check
          %p262 = pneg %p131
        $region22: #{ccam_dec.1} parent=11 // pred_check_branch
          %264 = sbr.rel (%p262) target = $region24
        $region23: #{ccam_dec.1} parent=11 // pred_region
          _
        $region24: #{ccam_dec.1} parent=11 // pred_fallthru
          _
        // Predicated region
        $region25: #{ccam_dec.1} parent=11 // pred_check
          %p265 = pneg %p152
        $region26: #{ccam_dec.1} parent=11 // pred_check_branch
          %267 = sbr.rel (%p265) target = $region28
        $region27: #{ccam_dec.1} parent=11 // pred_region
          _
        $region28: #{ccam_dec.1} parent=11 // pred_fallthru
          _
        // Predicated region
        $region29: #{ccam_dec.1} parent=11 // pred_check
          %p268 = pneg %p173
        $region30: #{ccam_dec.1} parent=11 // pred_check_branch
          %270 = sbr.rel (%p268) target = $region32
        $region31: #{ccam_dec.1} parent=11 // pred_region
          _
        $region32: #{ccam_dec.1} parent=11 // pred_fallthru
          _
        // Predicated region
        $region33: #{ccam_dec.1} parent=11 // pred_check
          %p271 = pneg %p194
        $region34: #{ccam_dec.1} parent=11 // pred_check_branch
          %273 = sbr.rel (%p271) target = $region36
        $region35: #{ccam_dec.1} parent=11 // pred_region
          _
        $region36: #{ccam_dec.1} parent=11 // pred_fallthru
          _
        // Predicated region
        $region37: #{ccam_dec.1} parent=11 // pred_check
          %p274 = pneg %p215
        $region38: #{ccam_dec.1} parent=11 // pred_check_branch
          %276 = sbr.rel (%p274) target = $region40
        $region39: #{ccam_dec.1} parent=11 // pred_region
          %s278 = ssub.s32 8192, 8192
          %279 = vsyncadd [#allocation3], %s278
          %s280 = sshll.u32 [#allocation2], 4
          %s281 = int_to_ptr.vmem [resolvable:$true] %s280
          %286 = dma.hbm_to_vmem [thread:$0]  %s8, 8192, %s281, [#allocation3], 256, 256, 16
        $region40: #{ccam_dec.1} parent=11 // pred_fallthru
          _
      $region12: #{ccam_dec.1} parent=5 // pred_fallthru
        _
      %p287 = scmp.lt.s32.totalorder %s16, 2
      // Predicated region
      $region41: #{ccam_dec.1} parent=5 // pred_check
        %p288 = pneg %p287
      $region42: #{ccam_dec.1} parent=5 // pred_check_branch
        %290 = sbr.rel (%p288) target = $region44
      $region43: #{ccam_dec.1} parent=5 // pred_region
        // Predicated region
        $region45: #{ccam_dec.1} parent=43 // pred_check
          %p291 = pneg %p36
        $region46: #{ccam_dec.1} parent=43 // pred_check_branch
          %293 = sbr.rel (%p291) target = $region48
        $region47: #{ccam_dec.1} parent=43 // pred_region
          %p294 = scmp.lt.s32.totalorder %s16, 1
          %s295 = scalar_select %p294, %s16, 1
          %s296 = smul.addr %s295, 2
          %s297 = smul.addr %s296, 4
          %s298 = scalar_lea.vmem %s0, %s297
        $region48: #{ccam_dec.1} parent=43 // pred_fallthru
          _
        // Predicated region
        $region49: #{ccam_dec.1} parent=43 // pred_check
          %p299 = pneg %p62
        $region50: #{ccam_dec.1} parent=43 // pred_check_branch
          %301 = sbr.rel (%p299) target = $region52
        $region51: #{ccam_dec.1} parent=43 // pred_region
          %p302 = scmp.lt.s32.totalorder %s16, 1
          %s303 = scalar_select %p302, %s16, 1
          %s304 = smul.addr %s303, 2
          %s305 = smul.addr %s304, 4
          %s306 = scalar_lea.vmem %s1, %s305
        $region52: #{ccam_dec.1} parent=43 // pred_fallthru
          _
      $region44: #{ccam_dec.1} parent=5 // pred_fallthru
        _
      %p307 = scmp.le.s32.totalorder 1, %s16
      %p308 = scmp.lt.s32.totalorder %s16, 3
      %p309 = pnand %p307, %p308
      %p310 = pneg %p309
      // Predicated region
      $region53: #{ccam_dec.1} parent=5 // pred_check
        _
      $region54: #{ccam_dec.1} parent=5 // pred_check_branch
        %312 = sbr.rel (%p309) target = $region56
      $region55: #{ccam_dec.1} parent=5 // pred_region
        %s313 = ssub.s32 %s16, 1
        // Predicated region
        $region57: #{ccam_dec.1} parent=55 // pred_check
          %p314 = pneg %p215
        $region58: #{ccam_dec.1} parent=55 // pred_check_branch
          %316 = sbr.rel (%p314) target = $region60
        $region59: #{ccam_dec.1} parent=55 // pred_region
          %317 = dma.done [#allocation3], 8192
        $region60: #{ccam_dec.1} parent=55 // pred_fallthru
          _
        %p318 = scmp.lt.s32.totalorder %s21, 1
        %s319 = scalar_select %p318, %s21, 1
        %s320 = smul.addr %s319, 2
        %s321 = smul.addr %s320, 4
        %s322 = scalar_lea.vmem %s0, %s321
        %p323 = pneg %p42
        %p324 = pneg %p39
        %p325 = scmp.lt.s32.totalorder %s21, 1
        %s326 = scalar_select %p325, %s21, 1
        %s327 = smul.addr %s326, 2
        %s328 = smul.addr %s327, 4
        %s329 = scalar_lea.vmem %s1, %s328
        %p330 = pneg %p68
        %p331 = pneg %p65
        %p332 = pneg %p89
        %p333 = pneg %p86
        %p334 = pneg %p110
        %p335 = pneg %p107
        %p336 = pneg %p131
        %p337 = pneg %p128
        %p338 = pneg %p152
        %p339 = pneg %p149
        %p340 = pneg %p173
        %p341 = pneg %p170
        %p342 = pneg %p194
        %p343 = pneg %p191
        %p344 = pneg %p215
        %p345 = pneg %p212
        %p346 = pneg %p241
        %p347 = pneg %p238
        %p348 = scmp.lt.s32.totalorder %s21, 1
        %s349 = scalar_select %p348, %s21, 1
        %s350 = smul.addr %s349, 2
        %s351 = smul.addr %s350, 4
        %s352 = scalar_lea.vmem %s9, %s351
        %p353 = scmp.lt.s32.totalorder %s21, 1
        %s354 = scalar_select %p353, %s21, 1
        %s355 = smul.addr %s354, 2
        %s356 = smul.addr %s355, 4
        %s357 = scalar_lea.vmem %s0, %s356
        %p358 = scmp.lt.s32.totalorder %s21, 1
        %s359 = scalar_select %p358, %s21, 1
        %s360 = smul.addr %s359, 2
        %s361 = smul.addr %s360, 4
        %s362 = scalar_lea.vmem %s1, %s361
        %p363 = scmp.lt.s32.totalorder %s21, 1
        %s364 = scalar_select %p363, %s21, 1
        %s365 = smul.addr %s364, 2
        %s366 = smul.addr %s365, 4
        %s367 = scalar_lea.vmem %s9, %s366
        %v368 = vld [vmem:[%s357] sm:$0xff]
        %v369 = vld [vmem:[%s362] sm:$0xff]
        %v370 = vld [vmem:[%s2] sm:$0xff]
        %v371 = vld [vmem:[%s2 + $0x8] sm:$0xff]
        %v372 = vld [vmem:[%s3] sm:$0xff]
        %v373 = vld [vmem:[%s3 + $0x8] sm:$0xff]
        %375 = vset.pattern.permute.xlu0 0
        %376 = vperm.xlu0 %375, %v372
        %v377 = vpop.permute.xlu0 %376
        %380 = vset.pattern.permute.xlu0 0
        %381 = vperm.xlu0 %380, %v373
        %v382 = vpop.permute.xlu0 %381
        %v385 = vcombine.high %v368, %v368
        %vm386 = vcmask 31744
        %v388 = vsel %vm386, %v370, 0
        %v391 = vsel %vm386, %v371, 0
        %vm393 = vcmask 1043456
        %v394 = vsel %vm393, %v368, 0
        %v396 = vsel %vm393, %v385, 0
        %398 = vmatprep.subr.mxu0 %v396
        %399 = vmatpush1.msra.mxu0 %v394
        %400 = vmatprep.subr.mxu0 0.0
        %401 = vmatpush1.msra.mxu0 0.0
        %402 = vmatprep.subr.mxu0 0.0
        %403 = vmatpush1.msra.mxu0 0.0
        %404 = vmatprep.subr.mxu0 0.0
        %405 = vmatpush1.msra.mxu0 0.0
        %406 = vmatprep.subr.mxu0 0.0
        %407 = vmatpush1.msra.mxu0 0.0
        %408 = vmatprep.subr.mxu0 0.0
        %409 = vmatpush1.msra.mxu0 0.0
        %410 = vmatprep.subr.mxu0 0.0
        %411 = vmatpush1.msra.mxu0 0.0
        %412 = vmatprep.subr.mxu0 0.0
        %413 = vmatpush1.msra.mxu0 0.0
        %414 = vmatprep.subr.mxu0 0.0
        %415 = vmatpush1.msra.mxu0 0.0
        %416 = vmatprep.subr.mxu0 0.0
        %417 = vmatpush1.msra.mxu0 0.0
        %418 = vmatprep.subr.mxu0 0.0
        %419 = vmatpush1.msra.mxu0 0.0
        %420 = vmatprep.subr.mxu0 0.0
        %421 = vmatpush1.msra.mxu0 0.0
        %422 = vmatprep.subr.mxu0 0.0
        %423 = vmatpush1.msra.mxu0 0.0
        %424 = vmatprep.subr.mxu0 0.0
        %425 = vmatpush1.msra.mxu0 0.0
        %426 = vmatprep.subr.mxu0 0.0
        %427 = vmatpush1.msra.mxu0 0.0
        %428 = vmatprep.subr.mxu0 0.0
        %429 = vmatpush1.msra.mxu0 0.0
        %430 = vmatprep.subr.mxu0 0.0
        %431 = vmatpush1.msra.mxu0 0.0
        %432 = vmatprep.subr.mxu0 0.0
        %433 = vmatpush1.msra.mxu0 0.0
        %434 = vmatprep.subr.mxu0 0.0
        %435 = vmatpush1.msra.mxu0 0.0
        %436 = vmatprep.subr.mxu0 0.0
        %437 = vmatpush1.msra.mxu0 0.0
        %438 = vmatprep.subr.mxu0 0.0
        %439 = vmatpush1.msra.mxu0 0.0
        %440 = vmatprep.subr.mxu0 0.0
        %441 = vmatpush1.msra.mxu0 0.0
        %442 = vmatprep.subr.mxu0 0.0
        %443 = vmatpush1.msra.mxu0 0.0
        %444 = vmatprep.subr.mxu0 0.0
        %445 = vmatpush1.msra.mxu0 0.0
        %446 = vmatprep.subr.mxu0 0.0
        %447 = vmatpush1.msra.mxu0 0.0
        %448 = vmatprep.subr.mxu0 0.0
        %449 = vmatpush1.msra.mxu0 0.0
        %450 = vmatprep.subr.mxu0 0.0
        %451 = vmatpush1.msra.mxu0 0.0
        %452 = vmatprep.subr.mxu0 0.0
        %453 = vmatpush1.msra.mxu0 0.0
        %454 = vmatprep.subr.mxu0 0.0
        %455 = vmatpush1.msra.mxu0 0.0
        %456 = vmatprep.subr.mxu0 0.0
        %457 = vmatpush1.msra.mxu0 0.0
        %458 = vmatprep.subr.mxu0 0.0
        %459 = vmatpush1.msra.mxu0 0.0
        %460 = vmatprep.subr.mxu0 0.0
        %461 = vmatpush1.msra.mxu0 0.0
        %462 = vmatprep.mubr.f32.mxu0 0.0
        %463 = vmatmul.mubr.f32.gmra.mrb[0].mxu0 %v388
        %v464 = vpop.f32.mrb[0].mxu0
        %v465 = vadd.f32 %v377, %v464
        %v466 = vpop.f32.mrb[0].mxu0
        %v467 = vadd.f32 %v377, %v466
        %468 = vmatprep.mubr.f32.mxu0 0.0
        %469 = vmatmul.mubr.f32.gmra.mrb[0].mxu0 %v391
        %v470 = vpop.f32.mrb[0].mxu0
        %v471 = vadd.f32 %v382, %v470
        %v472 = vpop.f32.mrb[0].mxu0
        %v473 = vadd.f32 %v382, %v472
        %474 = vdwg.mxu0
        %v475 = vmax.f32 %v465, 0.0
        %v476 = vmax.f32 %v467, 0.0
        %v477 = vmax.f32 %v471, 0.0
        %v478 = vmax.f32 %v473, 0.0
        %v479 = vld [vmem:[%s4] sm:$0xff]
        %v480 = vld [vmem:[%s4 + $0x8] sm:$0xff]
        %v481 = vld [vmem:[%s5] sm:$0xff]
        %v482 = vld [vmem:[%s5 + $0x8] sm:$0xff]
        %484 = vset.pattern.permute.xlu0 0
        %485 = vperm.xlu0 %484, %v481
        %v486 = vpop.permute.xlu0 %485
        %489 = vset.pattern.permute.xlu0 0
        %490 = vperm.xlu0 %489, %v482
        %v491 = vpop.permute.xlu0 %490
        %v494 = vcombine.high %v369, %v369
        %v496 = vsel %vm386, %v479, 0
        %v499 = vsel %vm386, %v480, 0
        %v501 = vsel %vm393, %v369, 0
        %v503 = vsel %vm393, %v494, 0
        %505 = vmatprep.subr.mxu0 %v503
        %506 = vmatpush1.msra.mxu0 %v501
        %507 = vmatprep.subr.mxu0 0.0
        %508 = vmatpush1.msra.mxu0 0.0
        %509 = vmatprep.subr.mxu0 0.0
        %510 = vmatpush1.msra.mxu0 0.0
        %511 = vmatprep.subr.mxu0 0.0
        %512 = vmatpush1.msra.mxu0 0.0
        %513 = vmatprep.subr.mxu0 0.0
        %514 = vmatpush1.msra.mxu0 0.0
        %515 = vmatprep.subr.mxu0 0.0
        %516 = vmatpush1.msra.mxu0 0.0
        %517 = vmatprep.subr.mxu0 0.0
        %518 = vmatpush1.msra.mxu0 0.0
        %519 = vmatprep.subr.mxu0 0.0
        %520 = vmatpush1.msra.mxu0 0.0
        %521 = vmatprep.subr.mxu0 0.0
        %522 = vmatpush1.msra.mxu0 0.0
        %523 = vmatprep.subr.mxu0 0.0
        %524 = vmatpush1.msra.mxu0 0.0
        %525 = vmatprep.subr.mxu0 0.0
        %526 = vmatpush1.msra.mxu0 0.0
        %527 = vmatprep.subr.mxu0 0.0
        %528 = vmatpush1.msra.mxu0 0.0
        %529 = vmatprep.subr.mxu0 0.0
        %530 = vmatpush1.msra.mxu0 0.0
        %531 = vmatprep.subr.mxu0 0.0
        %532 = vmatpush1.msra.mxu0 0.0
        %533 = vmatprep.subr.mxu0 0.0
        %534 = vmatpush1.msra.mxu0 0.0
        %535 = vmatprep.subr.mxu0 0.0
        %536 = vmatpush1.msra.mxu0 0.0
        %537 = vmatprep.subr.mxu0 0.0
        %538 = vmatpush1.msra.mxu0 0.0
        %539 = vmatprep.subr.mxu0 0.0
        %540 = vmatpush1.msra.mxu0 0.0
        %541 = vmatprep.subr.mxu0 0.0
        %542 = vmatpush1.msra.mxu0 0.0
        %543 = vmatprep.subr.mxu0 0.0
        %544 = vmatpush1.msra.mxu0 0.0
        %545 = vmatprep.subr.mxu0 0.0
        %546 = vmatpush1.msra.mxu0 0.0
        %547 = vmatprep.subr.mxu0 0.0
        %548 = vmatpush1.msra.mxu0 0.0
        %549 = vmatprep.subr.mxu0 0.0
        %550 = vmatpush1.msra.mxu0 0.0
        %551 = vmatprep.subr.mxu0 0.0
        %552 = vmatpush1.msra.mxu0 0.0
        %553 = vmatprep.subr.mxu0 0.0
        %554 = vmatpush1.msra.mxu0 0.0
        %555 = vmatprep.subr.mxu0 0.0
        %556 = vmatpush1.msra.mxu0 0.0
        %557 = vmatprep.subr.mxu0 0.0
        %558 = vmatpush1.msra.mxu0 0.0
        %559 = vmatprep.subr.mxu0 0.0
        %560 = vmatpush1.msra.mxu0 0.0
        %561 = vmatprep.subr.mxu0 0.0
        %562 = vmatpush1.msra.mxu0 0.0
        %563 = vmatprep.subr.mxu0 0.0
        %564 = vmatpush1.msra.mxu0 0.0
        %565 = vmatprep.subr.mxu0 0.0
        %566 = vmatpush1.msra.mxu0 0.0
        %567 = vmatprep.subr.mxu0 0.0
        %568 = vmatpush1.msra.mxu0 0.0
        %569 = vmatprep.mubr.f32.mxu0 0.0
        %570 = vmatmul.mubr.f32.gmra.mrb[0].mxu0 %v496
        %v571 = vpop.f32.mrb[0].mxu0
        %v572 = vadd.f32 %v486, %v571
        %v573 = vpop.f32.mrb[0].mxu0
        %v574 = vadd.f32 %v486, %v573
        %575 = vmatprep.mubr.f32.mxu0 0.0
        %576 = vmatmul.mubr.f32.gmra.mrb[0].mxu0 %v499
        %v577 = vpop.f32.mrb[0].mxu0
        %v578 = vadd.f32 %v491, %v577
        %v579 = vpop.f32.mrb[0].mxu0
        %v580 = vadd.f32 %v491, %v579
        %581 = vdwg.mxu0
        %v582 = vmax.f32 %v572, 0.0
        %v583 = vmax.f32 %v574, 0.0
        %v584 = vmax.f32 %v578, 0.0
        %v585 = vmax.f32 %v580, 0.0
        %587 = vmatprep.subr.mxu0 %v583
        %588 = vmatpush1.xpose.msra.mxu0 %v582
        %589 = vmatprep.subr.mxu0 %v585
        %590 = vmatpush1.xpose.msra.mxu0 %v584
        %591 = vmatprep.subr.mxu0 0.0
        %592 = vmatpush1.xpose.msra.mxu0 0.0
        %593 = vmatprep.subr.mxu0 0.0
        %594 = vmatpush1.xpose.msra.mxu0 0.0
        %595 = vmatprep.subr.mxu0 0.0
        %596 = vmatpush1.xpose.msra.mxu0 0.0
        %597 = vmatprep.subr.mxu0 0.0
        %598 = vmatpush1.xpose.msra.mxu0 0.0
        %599 = vmatprep.subr.mxu0 0.0
        %600 = vmatpush1.xpose.msra.mxu0 0.0
        %601 = vmatprep.subr.mxu0 0.0
        %602 = vmatpush1.xpose.msra.mxu0 0.0
        %603 = vmatprep.subr.mxu0 0.0
        %604 = vmatpush1.xpose.msra.mxu0 0.0
        %605 = vmatprep.subr.mxu0 0.0
        %606 = vmatpush1.xpose.msra.mxu0 0.0
        %607 = vmatprep.subr.mxu0 0.0
        %608 = vmatpush1.xpose.msra.mxu0 0.0
        %609 = vmatprep.subr.mxu0 0.0
        %610 = vmatpush1.xpose.msra.mxu0 0.0
        %611 = vmatprep.subr.mxu0 0.0
        %612 = vmatpush1.xpose.msra.mxu0 0.0
        %613 = vmatprep.subr.mxu0 0.0
        %614 = vmatpush1.xpose.msra.mxu0 0.0
        %615 = vmatprep.subr.mxu0 0.0
        %616 = vmatpush1.xpose.msra.mxu0 0.0
        %617 = vmatprep.subr.mxu0 0.0
        %618 = vmatpush1.xpose.msra.mxu0 0.0
        %619 = vmatprep.subr.mxu0 0.0
        %620 = vmatpush1.xpose.msra.mxu0 0.0
        %621 = vmatprep.subr.mxu0 0.0
        %622 = vmatpush1.xpose.msra.mxu0 0.0
        %623 = vmatprep.subr.mxu0 0.0
        %624 = vmatpush1.xpose.msra.mxu0 0.0
        %625 = vmatprep.subr.mxu0 0.0
        %626 = vmatpush1.xpose.msra.mxu0 0.0
        %627 = vmatprep.subr.mxu0 0.0
        %628 = vmatpush1.xpose.msra.mxu0 0.0
        %629 = vmatprep.subr.mxu0 0.0
        %630 = vmatpush1.xpose.msra.mxu0 0.0
        %631 = vmatprep.subr.mxu0 0.0
        %632 = vmatpush1.xpose.msra.mxu0 0.0
        %633 = vmatprep.subr.mxu0 0.0
        %634 = vmatpush1.xpose.msra.mxu0 0.0
        %635 = vmatprep.subr.mxu0 0.0
        %636 = vmatpush1.xpose.msra.mxu0 0.0
        %637 = vmatprep.subr.mxu0 0.0
        %638 = vmatpush1.xpose.msra.mxu0 0.0
        %639 = vmatprep.subr.mxu0 0.0
        %640 = vmatpush1.xpose.msra.mxu0 0.0
        %641 = vmatprep.subr.mxu0 0.0
        %642 = vmatpush1.xpose.msra.mxu0 0.0
        %643 = vmatprep.subr.mxu0 0.0
        %644 = vmatpush1.xpose.msra.mxu0 0.0
        %645 = vmatprep.subr.mxu0 0.0
        %646 = vmatpush1.xpose.msra.mxu0 0.0
        %647 = vmatprep.subr.mxu0 0.0
        %648 = vmatpush1.xpose.msra.mxu0 0.0
        %649 = vmatprep.subr.mxu0 0.0
        %650 = vmatpush1.xpose.msra.mxu0 0.0
        %651 = vmatprep.mubr.f32.mxu0 %v385
        %652 = vmatmul.mubr.f32.gmra.mrb[0].mxu0 %v368
        %v653 = vpop.f32.mrb[0].mxu0
        %v654 = vadd.f32 0.0, %v653
        %v655 = vpop.f32.mrb[0].mxu0
        %656 = vdwg.mxu0
        %vm657 = vcmask 125952
        %v658 = vsel %vm657, %v654, -inf
        %659 = vmax.xlane.f32.xlu0 %v658
        %v660 = vpop.xlane.xlu0 %659
        %v661 = vsub.f32 %v654, %v660
        %v662 = vmul.f32 %v661, 1.442695
        %v663 = vpow.pop %v662
        %v664 = vsel %vm657, %v663, 0.0
        %665 = vadd.xlane.f32.xlu0 %v664
        %v666 = vpop.xlane.xlu0 %665
        %v667 = vrcp.pop %v666
        %v668 = vmul.f32 %v663, %v667
        %vm669 = vcmask 130048
        %v671 = vsel %vm669, %v668, 0
        %673 = vmatprep.subr.mxu0 %v476
        %674 = vmatpush1.msra.mxu0 %v475
        %675 = vmatprep.subr.mxu0 %v478
        %676 = vmatpush1.msra.mxu0 %v477
        %677 = vmatprep.subr.mxu0 0.0
        %678 = vmatpush1.msra.mxu0 0.0
        %679 = vmatprep.subr.mxu0 0.0
        %680 = vmatpush1.msra.mxu0 0.0
        %681 = vmatprep.subr.mxu0 0.0
        %682 = vmatpush1.msra.mxu0 0.0
        %683 = vmatprep.subr.mxu0 0.0
        %684 = vmatpush1.msra.mxu0 0.0
        %685 = vmatprep.subr.mxu0 0.0
        %686 = vmatpush1.msra.mxu0 0.0
        %687 = vmatprep.subr.mxu0 0.0
        %688 = vmatpush1.msra.mxu0 0.0
        %689 = vmatprep.subr.mxu0 0.0
        %690 = vmatpush1.msra.mxu0 0.0
        %691 = vmatprep.subr.mxu0 0.0
        %692 = vmatpush1.msra.mxu0 0.0
        %693 = vmatprep.subr.mxu0 0.0
        %694 = vmatpush1.msra.mxu0 0.0
        %695 = vmatprep.subr.mxu0 0.0
        %696 = vmatpush1.msra.mxu0 0.0
        %697 = vmatprep.subr.mxu0 0.0
        %698 = vmatpush1.msra.mxu0 0.0
        %699 = vmatprep.subr.mxu0 0.0
        %700 = vmatpush1.msra.mxu0 0.0
        %701 = vmatprep.subr.mxu0 0.0
        %702 = vmatpush1.msra.mxu0 0.0
        %703 = vmatprep.subr.mxu0 0.0
        %704 = vmatpush1.msra.mxu0 0.0
        %705 = vmatprep.subr.mxu0 0.0
        %706 = vmatpush1.msra.mxu0 0.0
        %707 = vmatprep.subr.mxu0 0.0
        %708 = vmatpush1.msra.mxu0 0.0
        %709 = vmatprep.subr.mxu0 0.0
        %710 = vmatpush1.msra.mxu0 0.0
        %711 = vmatprep.subr.mxu0 0.0
        %712 = vmatpush1.msra.mxu0 0.0
        %713 = vmatprep.subr.mxu0 0.0
        %714 = vmatpush1.msra.mxu0 0.0
        %715 = vmatprep.subr.mxu0 0.0
        %716 = vmatpush1.msra.mxu0 0.0
        %717 = vmatprep.subr.mxu0 0.0
        %718 = vmatpush1.msra.mxu0 0.0
        %719 = vmatprep.subr.mxu0 0.0
        %720 = vmatpush1.msra.mxu0 0.0
        %721 = vmatprep.subr.mxu0 0.0
        %722 = vmatpush1.msra.mxu0 0.0
        %723 = vmatprep.subr.mxu0 0.0
        %724 = vmatpush1.msra.mxu0 0.0
        %725 = vmatprep.subr.mxu0 0.0
        %726 = vmatpush1.msra.mxu0 0.0
        %727 = vmatprep.subr.mxu0 0.0
        %728 = vmatpush1.msra.mxu0 0.0
        %729 = vmatprep.subr.mxu0 0.0
        %730 = vmatpush1.msra.mxu0 0.0
        %731 = vmatprep.subr.mxu0 0.0
        %732 = vmatpush1.msra.mxu0 0.0
        %733 = vmatprep.subr.mxu0 0.0
        %734 = vmatpush1.msra.mxu0 0.0
        %735 = vmatprep.subr.mxu0 0.0
        %736 = vmatpush1.msra.mxu0 0.0
        %737 = vmatprep.mubr.f32.mxu0 0.0
        %738 = vmatmul.mubr.f32.gmra.mrb[0].mxu0 %v671
        %v739 = vpop.f32.mrb[0].mxu0
        %v740 = vadd.f32 0.0, %v739
        %v741 = vpop.f32.mrb[0].mxu0
        %v742 = vadd.f32 0.0, %v741
        %743 = vdwg.mxu0
        %v745 = vrot.slane %v740, 4
        %746 = vrot.lane.b32.xlu0 %v745, 64
        %v747 = vpop.permute.xlu0 %746
        %v750 = vrot.slane %v742, 4
        %751 = vrot.lane.b32.xlu0 %v750, 64
        %v752 = vpop.permute.xlu0 %751
        %v754 = vsel %vm393, %v740, %v747
        %v755 = vsel %vm393, %v742, %v752
        %v756 = vld [vmem:[%s6] sm:$0xf]
        %v758 = vsel %vm669, %v756, 0
        %760 = vmatprep.subr.mxu0 0.0
        %761 = vmatpush1.msra.mxu0 %v754
        %762 = vmatprep.subr.mxu0 0.0
        %763 = vmatpush1.msra.mxu0 %v755
        %764 = vmatprep.subr.mxu0 0.0
        %765 = vmatpush1.msra.mxu0 0.0
        %766 = vmatprep.subr.mxu0 0.0
        %767 = vmatpush1.msra.mxu0 0.0
        %768 = vmatprep.subr.mxu0 0.0
        %769 = vmatpush1.msra.mxu0 0.0
        %770 = vmatprep.subr.mxu0 0.0
        %771 = vmatpush1.msra.mxu0 0.0
        %772 = vmatprep.subr.mxu0 0.0
        %773 = vmatpush1.msra.mxu0 0.0
        %774 = vmatprep.subr.mxu0 0.0
        %775 = vmatpush1.msra.mxu0 0.0
        %776 = vmatprep.subr.mxu0 0.0
        %777 = vmatpush1.msra.mxu0 0.0
        %778 = vmatprep.subr.mxu0 0.0
        %779 = vmatpush1.msra.mxu0 0.0
        %780 = vmatprep.subr.mxu0 0.0
        %781 = vmatpush1.msra.mxu0 0.0
        %782 = vmatprep.subr.mxu0 0.0
        %783 = vmatpush1.msra.mxu0 0.0
        %784 = vmatprep.subr.mxu0 0.0
        %785 = vmatpush1.msra.mxu0 0.0
        %786 = vmatprep.subr.mxu0 0.0
        %787 = vmatpush1.msra.mxu0 0.0
        %788 = vmatprep.subr.mxu0 0.0
        %789 = vmatpush1.msra.mxu0 0.0
        %790 = vmatprep.subr.mxu0 0.0
        %791 = vmatpush1.msra.mxu0 0.0
        %792 = vmatprep.subr.mxu0 0.0
        %793 = vmatpush1.msra.mxu0 0.0
        %794 = vmatprep.subr.mxu0 0.0
        %795 = vmatpush1.msra.mxu0 0.0
        %796 = vmatprep.subr.mxu0 0.0
        %797 = vmatpush1.msra.mxu0 0.0
        %798 = vmatprep.subr.mxu0 0.0
        %799 = vmatpush1.msra.mxu0 0.0
        %800 = vmatprep.subr.mxu0 0.0
        %801 = vmatpush1.msra.mxu0 0.0
        %802 = vmatprep.subr.mxu0 0.0
        %803 = vmatpush1.msra.mxu0 0.0
        %804 = vmatprep.subr.mxu0 0.0
        %805 = vmatpush1.msra.mxu0 0.0
        %806 = vmatprep.subr.mxu0 0.0
        %807 = vmatpush1.msra.mxu0 0.0
        %808 = vmatprep.subr.mxu0 0.0
        %809 = vmatpush1.msra.mxu0 0.0
        %810 = vmatprep.subr.mxu0 0.0
        %811 = vmatpush1.msra.mxu0 0.0
        %812 = vmatprep.subr.mxu0 0.0
        %813 = vmatpush1.msra.mxu0 0.0
        %814 = vmatprep.subr.mxu0 0.0
        %815 = vmatpush1.msra.mxu0 0.0
        %816 = vmatprep.subr.mxu0 0.0
        %817 = vmatpush1.msra.mxu0 0.0
        %818 = vmatprep.subr.mxu0 0.0
        %819 = vmatpush1.msra.mxu0 0.0
        %820 = vmatprep.subr.mxu0 0.0
        %821 = vmatpush1.msra.mxu0 0.0
        %822 = vmatprep.subr.mxu0 0.0
        %823 = vmatpush1.msra.mxu0 0.0
        %824 = vmatprep.mubr.f32.mxu0 0.0
        %825 = vmatmul.mubr.f32.gmra.mrb[0].mxu0 %v758
        %v826 = vpop.f32.mrb[0].mxu0
        %v827 = vadd.f32 0.0, %v826
        %v828 = vpop.f32.mrb[0].mxu0
        %829 = vdwg.mxu0
        %s830 = scalar_lea.vmem %s6, 4
        %v831 = vld [vmem:[%s830] sm:$0xf]
        %v833 = vsel %vm669, %v831, 0
        %835 = vmatprep.subr.mxu0 0.0
        %836 = vmatpush1.msra.mxu0 %v754
        %837 = vmatprep.subr.mxu0 0.0
        %838 = vmatpush1.msra.mxu0 %v755
        %839 = vmatprep.subr.mxu0 0.0
        %840 = vmatpush1.msra.mxu0 0.0
        %841 = vmatprep.subr.mxu0 0.0
        %842 = vmatpush1.msra.mxu0 0.0
        %843 = vmatprep.subr.mxu0 0.0
        %844 = vmatpush1.msra.mxu0 0.0
        %845 = vmatprep.subr.mxu0 0.0
        %846 = vmatpush1.msra.mxu0 0.0
        %847 = vmatprep.subr.mxu0 0.0
        %848 = vmatpush1.msra.mxu0 0.0
        %849 = vmatprep.subr.mxu0 0.0
        %850 = vmatpush1.msra.mxu0 0.0
        %851 = vmatprep.subr.mxu0 0.0
        %852 = vmatpush1.msra.mxu0 0.0
        %853 = vmatprep.subr.mxu0 0.0
        %854 = vmatpush1.msra.mxu0 0.0
        %855 = vmatprep.subr.mxu0 0.0
        %856 = vmatpush1.msra.mxu0 0.0
        %857 = vmatprep.subr.mxu0 0.0
        %858 = vmatpush1.msra.mxu0 0.0
        %859 = vmatprep.subr.mxu0 0.0
        %860 = vmatpush1.msra.mxu0 0.0
        %861 = vmatprep.subr.mxu0 0.0
        %862 = vmatpush1.msra.mxu0 0.0
        %863 = vmatprep.subr.mxu0 0.0
        %864 = vmatpush1.msra.mxu0 0.0
        %865 = vmatprep.subr.mxu0 0.0
        %866 = vmatpush1.msra.mxu0 0.0
        %867 = vmatprep.subr.mxu0 0.0
        %868 = vmatpush1.msra.mxu0 0.0
        %869 = vmatprep.subr.mxu0 0.0
        %870 = vmatpush1.msra.mxu0 0.0
        %871 = vmatprep.subr.mxu0 0.0
        %872 = vmatpush1.msra.mxu0 0.0
        %873 = vmatprep.subr.mxu0 0.0
        %874 = vmatpush1.msra.mxu0 0.0
        %875 = vmatprep.subr.mxu0 0.0
        %876 = vmatpush1.msra.mxu0 0.0
        %877 = vmatprep.subr.mxu0 0.0
        %878 = vmatpush1.msra.mxu0 0.0
        %879 = vmatprep.subr.mxu0 0.0
        %880 = vmatpush1.msra.mxu0 0.0
        %881 = vmatprep.subr.mxu0 0.0
        %882 = vmatpush1.msra.mxu0 0.0
        %883 = vmatprep.subr.mxu0 0.0
        %884 = vmatpush1.msra.mxu0 0.0
        %885 = vmatprep.subr.mxu0 0.0
        %886 = vmatpush1.msra.mxu0 0.0
        %887 = vmatprep.subr.mxu0 0.0
        %888 = vmatpush1.msra.mxu0 0.0
        %889 = vmatprep.subr.mxu0 0.0
        %890 = vmatpush1.msra.mxu0 0.0
        %891 = vmatprep.subr.mxu0 0.0
        %892 = vmatpush1.msra.mxu0 0.0
        %893 = vmatprep.subr.mxu0 0.0
        %894 = vmatpush1.msra.mxu0 0.0
        %895 = vmatprep.subr.mxu0 0.0
        %896 = vmatpush1.msra.mxu0 0.0
        %897 = vmatprep.subr.mxu0 0.0
        %898 = vmatpush1.msra.mxu0 0.0
        %899 = vmatprep.mubr.f32.mxu0 0.0
        %900 = vmatmul.mubr.f32.gmra.mrb[0].mxu0 %v833
        %v901 = vpop.f32.mrb[0].mxu0
        %v902 = vadd.f32 0.0, %v901
        %v903 = vpop.f32.mrb[0].mxu0
        %904 = vdwg.mxu0
        %s905 = scalar_lea.vmem %s6, 8
        %v906 = vld [vmem:[%s905] sm:$0xf]
        %v908 = vsel %vm669, %v906, 0
        %910 = vmatprep.subr.mxu0 0.0
        %911 = vmatpush1.msra.mxu0 %v754
        %912 = vmatprep.subr.mxu0 0.0
        %913 = vmatpush1.msra.mxu0 %v755
        %914 = vmatprep.subr.mxu0 0.0
        %915 = vmatpush1.msra.mxu0 0.0
        %916 = vmatprep.subr.mxu0 0.0
        %917 = vmatpush1.msra.mxu0 0.0
        %918 = vmatprep.subr.mxu0 0.0
        %919 = vmatpush1.msra.mxu0 0.0
        %920 = vmatprep.subr.mxu0 0.0
        %921 = vmatpush1.msra.mxu0 0.0
        %922 = vmatprep.subr.mxu0 0.0
        %923 = vmatpush1.msra.mxu0 0.0
        %924 = vmatprep.subr.mxu0 0.0
        %925 = vmatpush1.msra.mxu0 0.0
        %926 = vmatprep.subr.mxu0 0.0
        %927 = vmatpush1.msra.mxu0 0.0
        %928 = vmatprep.subr.mxu0 0.0
        %929 = vmatpush1.msra.mxu0 0.0
        %930 = vmatprep.subr.mxu0 0.0
        %931 = vmatpush1.msra.mxu0 0.0
        %932 = vmatprep.subr.mxu0 0.0
        %933 = vmatpush1.msra.mxu0 0.0
        %934 = vmatprep.subr.mxu0 0.0
        %935 = vmatpush1.msra.mxu0 0.0
        %936 = vmatprep.subr.mxu0 0.0
        %937 = vmatpush1.msra.mxu0 0.0
        %938 = vmatprep.subr.mxu0 0.0
        %939 = vmatpush1.msra.mxu0 0.0
        %940 = vmatprep.subr.mxu0 0.0
        %941 = vmatpush1.msra.mxu0 0.0
        %942 = vmatprep.subr.mxu0 0.0
        %943 = vmatpush1.msra.mxu0 0.0
        %944 = vmatprep.subr.mxu0 0.0
        %945 = vmatpush1.msra.mxu0 0.0
        %946 = vmatprep.subr.mxu0 0.0
        %947 = vmatpush1.msra.mxu0 0.0
        %948 = vmatprep.subr.mxu0 0.0
        %949 = vmatpush1.msra.mxu0 0.0
        %950 = vmatprep.subr.mxu0 0.0
        %951 = vmatpush1.msra.mxu0 0.0
        %952 = vmatprep.subr.mxu0 0.0
        %953 = vmatpush1.msra.mxu0 0.0
        %954 = vmatprep.subr.mxu0 0.0
        %955 = vmatpush1.msra.mxu0 0.0
        %956 = vmatprep.subr.mxu0 0.0
        %957 = vmatpush1.msra.mxu0 0.0
        %958 = vmatprep.subr.mxu0 0.0
        %959 = vmatpush1.msra.mxu0 0.0
        %960 = vmatprep.subr.mxu0 0.0
        %961 = vmatpush1.msra.mxu0 0.0
        %962 = vmatprep.subr.mxu0 0.0
        %963 = vmatpush1.msra.mxu0 0.0
        %964 = vmatprep.subr.mxu0 0.0
        %965 = vmatpush1.msra.mxu0 0.0
        %966 = vmatprep.subr.mxu0 0.0
        %967 = vmatpush1.msra.mxu0 0.0
        %968 = vmatprep.subr.mxu0 0.0
        %969 = vmatpush1.msra.mxu0 0.0
        %970 = vmatprep.subr.mxu0 0.0
        %971 = vmatpush1.msra.mxu0 0.0
        %972 = vmatprep.subr.mxu0 0.0
        %973 = vmatpush1.msra.mxu0 0.0
        %974 = vmatprep.mubr.f32.mxu0 0.0
        %975 = vmatmul.mubr.f32.gmra.mrb[0].mxu0 %v908
        %v976 = vpop.f32.mrb[0].mxu0
        %v977 = vadd.f32 0.0, %v976
        %v978 = vpop.f32.mrb[0].mxu0
        %979 = vdwg.mxu0
        %s980 = scalar_lea.vmem %s6, 12
        %v981 = vld [vmem:[%s980] sm:$0xf]
        %v983 = vsel %vm669, %v981, 0
        %985 = vmatprep.subr.mxu0 0.0
        %986 = vmatpush1.msra.mxu0 %v754
        %987 = vmatprep.subr.mxu0 0.0
        %988 = vmatpush1.msra.mxu0 %v755
        %989 = vmatprep.subr.mxu0 0.0
        %990 = vmatpush1.msra.mxu0 0.0
        %991 = vmatprep.subr.mxu0 0.0
        %992 = vmatpush1.msra.mxu0 0.0
        %993 = vmatprep.subr.mxu0 0.0
        %994 = vmatpush1.msra.mxu0 0.0
        %995 = vmatprep.subr.mxu0 0.0
        %996 = vmatpush1.msra.mxu0 0.0
        %997 = vmatprep.subr.mxu0 0.0
        %998 = vmatpush1.msra.mxu0 0.0
        %999 = vmatprep.subr.mxu0 0.0
        %1000 = vmatpush1.msra.mxu0 0.0
        %1001 = vmatprep.subr.mxu0 0.0
        %1002 = vmatpush1.msra.mxu0 0.0
        %1003 = vmatprep.subr.mxu0 0.0
        %1004 = vmatpush1.msra.mxu0 0.0
        %1005 = vmatprep.subr.mxu0 0.0
        %1006 = vmatpush1.msra.mxu0 0.0
        %1007 = vmatprep.subr.mxu0 0.0
        %1008 = vmatpush1.msra.mxu0 0.0
        %1009 = vmatprep.subr.mxu0 0.0
        %1010 = vmatpush1.msra.mxu0 0.0
        %1011 = vmatprep.subr.mxu0 0.0
        %1012 = vmatpush1.msra.mxu0 0.0
        %1013 = vmatprep.subr.mxu0 0.0
        %1014 = vmatpush1.msra.mxu0 0.0
        %1015 = vmatprep.subr.mxu0 0.0
        %1016 = vmatpush1.msra.mxu0 0.0
        %1017 = vmatprep.subr.mxu0 0.0
        %1018 = vmatpush1.msra.mxu0 0.0
        %1019 = vmatprep.subr.mxu0 0.0
        %1020 = vmatpush1.msra.mxu0 0.0
        %1021 = vmatprep.subr.mxu0 0.0
        %1022 = vmatpush1.msra.mxu0 0.0
        %1023 = vmatprep.subr.mxu0 0.0
        %1024 = vmatpush1.msra.mxu0 0.0
        %1025 = vmatprep.subr.mxu0 0.0
        %1026 = vmatpush1.msra.mxu0 0.0
        %1027 = vmatprep.subr.mxu0 0.0
        %1028 = vmatpush1.msra.mxu0 0.0
        %1029 = vmatprep.subr.mxu0 0.0
        %1030 = vmatpush1.msra.mxu0 0.0
        %1031 = vmatprep.subr.mxu0 0.0
        %1032 = vmatpush1.msra.mxu0 0.0
        %1033 = vmatprep.subr.mxu0 0.0
        %1034 = vmatpush1.msra.mxu0 0.0
        %1035 = vmatprep.subr.mxu0 0.0
        %1036 = vmatpush1.msra.mxu0 0.0
        %1037 = vmatprep.subr.mxu0 0.0
        %1038 = vmatpush1.msra.mxu0 0.0
        %1039 = vmatprep.subr.mxu0 0.0
        %1040 = vmatpush1.msra.mxu0 0.0
        %1041 = vmatprep.subr.mxu0 0.0
        %1042 = vmatpush1.msra.mxu0 0.0
        %1043 = vmatprep.subr.mxu0 0.0
        %1044 = vmatpush1.msra.mxu0 0.0
        %1045 = vmatprep.subr.mxu0 0.0
        %1046 = vmatpush1.msra.mxu0 0.0
        %1047 = vmatprep.subr.mxu0 0.0
        %1048 = vmatpush1.msra.mxu0 0.0
        %1049 = vmatprep.mubr.f32.mxu0 0.0
        %1050 = vmatmul.mubr.f32.gmra.mrb[0].mxu0 %v983
        %v1051 = vpop.f32.mrb[0].mxu0
        %v1052 = vadd.f32 0.0, %v1051
        %v1053 = vpop.f32.mrb[0].mxu0
        %1054 = vdwg.mxu0
        %1056 = vrot.lane.b32.xlu0 %v902, 64
        %v1057 = vpop.permute.xlu0 %1056
        %1060 = vrot.lane.b32.xlu0 %v1052, 64
        %v1061 = vpop.permute.xlu0 %1060
        %vm1063 = vcmask 523264
        %v1064 = vsel %vm1063, %v827, %v1057
        %v1065 = vsel %vm1063, %v977, %v1061
        %v1066 = vld [vmem:[#allocation2] sm:$0xff]
        %v1067 = vld [vmem:[#allocation2 + $0x8] sm:$0xff]
        %v1068 = vld [vmem:[#allocation2 + $0x10] sm:$0xff]
        %v1069 = vld [vmem:[#allocation2 + $0x18] sm:$0xff]
        %v1070 = vld [vmem:[#allocation2 + $0x20] sm:$0xff]
        %v1071 = vld [vmem:[#allocation2 + $0x28] sm:$0xff]
        %v1072 = vld [vmem:[#allocation2 + $0x30] sm:$0xff]
        %v1073 = vld [vmem:[#allocation2 + $0x38] sm:$0xff]
        %v1074 = vld [vmem:[#allocation2 + $0x40] sm:$0xff]
        %v1075 = vld [vmem:[#allocation2 + $0x48] sm:$0xff]
        %v1076 = vld [vmem:[#allocation2 + $0x50] sm:$0xff]
        %v1077 = vld [vmem:[#allocation2 + $0x58] sm:$0xff]
        %v1078 = vld [vmem:[#allocation2 + $0x60] sm:$0xff]
        %v1079 = vld [vmem:[#allocation2 + $0x68] sm:$0xff]
        %v1080 = vld [vmem:[#allocation2 + $0x70] sm:$0xff]
        %v1081 = vld [vmem:[#allocation2 + $0x78] sm:$0xff]
        %v1082 = vld [vmem:[#allocation2 + $0x80] sm:$0xff]
        %v1083 = vld [vmem:[#allocation2 + $0x88] sm:$0xff]
        %v1084 = vld [vmem:[#allocation2 + $0x90] sm:$0xff]
        %v1085 = vld [vmem:[#allocation2 + $0x98] sm:$0xff]
        %v1086 = vld [vmem:[#allocation2 + $0xa0] sm:$0xff]
        %v1087 = vld [vmem:[#allocation2 + $0xa8] sm:$0xff]
        %v1088 = vld [vmem:[#allocation2 + $0xb0] sm:$0xff]
        %v1089 = vld [vmem:[#allocation2 + $0xb8] sm:$0xff]
        %v1090 = vld [vmem:[#allocation2 + $0xc0] sm:$0xff]
        %v1091 = vld [vmem:[#allocation2 + $0xc8] sm:$0xff]
        %v1092 = vld [vmem:[#allocation2 + $0xd0] sm:$0xff]
        %v1093 = vld [vmem:[#allocation2 + $0xd8] sm:$0xff]
        %v1094 = vld [vmem:[#allocation2 + $0xe0] sm:$0xff]
        %v1095 = vld [vmem:[#allocation2 + $0xe8] sm:$0xff]
        %v1096 = vld [vmem:[#allocation2 + $0xf0] sm:$0xff]
        %v1097 = vld [vmem:[#allocation2 + $0xf8] sm:$0xff]
        %v1098 = vld [vmem:[#allocation2 + $0x100] sm:$0xff]
        %v1099 = vld [vmem:[#allocation2 + $0x108] sm:$0xff]
        %v1100 = vld [vmem:[#allocation2 + $0x110] sm:$0xff]
        %v1101 = vld [vmem:[#allocation2 + $0x118] sm:$0xff]
        %v1102 = vld [vmem:[#allocation2 + $0x120] sm:$0xff]
        %v1103 = vld [vmem:[#allocation2 + $0x128] sm:$0xff]
        %v1104 = vld [vmem:[#allocation2 + $0x130] sm:$0xff]
        %v1105 = vld [vmem:[#allocation2 + $0x138] sm:$0xff]
        %v1106 = vld [vmem:[#allocation2 + $0x140] sm:$0xff]
        %v1107 = vld [vmem:[#allocation2 + $0x148] sm:$0xff]
        %v1108 = vld [vmem:[#allocation2 + $0x150] sm:$0xff]
        %v1109 = vld [vmem:[#allocation2 + $0x158] sm:$0xff]
        %v1110 = vld [vmem:[#allocation2 + $0x160] sm:$0xff]
        %v1111 = vld [vmem:[#allocation2 + $0x168] sm:$0xff]
        %v1112 = vld [vmem:[#allocation2 + $0x170] sm:$0xff]
        %v1113 = vld [vmem:[#allocation2 + $0x178] sm:$0xff]
        %v1114 = vld [vmem:[#allocation2 + $0x180] sm:$0xff]
        %v1115 = vld [vmem:[#allocation2 + $0x188] sm:$0xff]
        %v1116 = vld [vmem:[#allocation2 + $0x190] sm:$0xff]
        %v1117 = vld [vmem:[#allocation2 + $0x198] sm:$0xff]
        %v1118 = vld [vmem:[#allocation2 + $0x1a0] sm:$0xff]
        %v1119 = vld [vmem:[#allocation2 + $0x1a8] sm:$0xff]
        %v1120 = vld [vmem:[#allocation2 + $0x1b0] sm:$0xff]
        %v1121 = vld [vmem:[#allocation2 + $0x1b8] sm:$0xff]
        %v1122 = vld [vmem:[#allocation2 + $0x1c0] sm:$0xff]
        %v1123 = vld [vmem:[#allocation2 + $0x1c8] sm:$0xff]
        %v1124 = vld [vmem:[#allocation2 + $0x1d0] sm:$0xff]
        %v1125 = vld [vmem:[#allocation2 + $0x1d8] sm:$0xff]
        %v1126 = vld [vmem:[#allocation2 + $0x1e0] sm:$0xff]
        %v1127 = vld [vmem:[#allocation2 + $0x1e8] sm:$0xff]
        %v1128 = vld [vmem:[#allocation2 + $0x1f0] sm:$0xff]
        %v1129 = vld [vmem:[#allocation2 + $0x1f8] sm:$0xff]
        %1130 = vmatprep.subr.mxu0 %v1067
        %1131 = vmatpush1.msra.mxu0 %v1066
        %1132 = vmatprep.subr.mxu0 %v1069
        %1133 = vmatpush1.msra.mxu0 %v1068
        %1134 = vmatprep.subr.mxu0 %v1071
        %1135 = vmatpush1.msra.mxu0 %v1070
        %1136 = vmatprep.subr.mxu0 %v1073
        %1137 = vmatpush1.msra.mxu0 %v1072
        %1138 = vmatprep.subr.mxu0 %v1075
        %1139 = vmatpush1.msra.mxu0 %v1074
        %1140 = vmatprep.subr.mxu0 %v1077
        %1141 = vmatpush1.msra.mxu0 %v1076
        %1142 = vmatprep.subr.mxu0 %v1079
        %1143 = vmatpush1.msra.mxu0 %v1078
        %1144 = vmatprep.subr.mxu0 %v1081
        %1145 = vmatpush1.msra.mxu0 %v1080
        %1146 = vmatprep.subr.mxu0 %v1083
        %1147 = vmatpush1.msra.mxu0 %v1082
        %1148 = vmatprep.subr.mxu0 %v1085
        %1149 = vmatpush1.msra.mxu0 %v1084
        %1150 = vmatprep.subr.mxu0 %v1087
        %1151 = vmatpush1.msra.mxu0 %v1086
        %1152 = vmatprep.subr.mxu0 %v1089
        %1153 = vmatpush1.msra.mxu0 %v1088
        %1154 = vmatprep.subr.mxu0 %v1091
        %1155 = vmatpush1.msra.mxu0 %v1090
        %1156 = vmatprep.subr.mxu0 %v1093
        %1157 = vmatpush1.msra.mxu0 %v1092
        %1158 = vmatprep.subr.mxu0 %v1095
        %1159 = vmatpush1.msra.mxu0 %v1094
        %1160 = vmatprep.subr.mxu0 %v1097
        %1161 = vmatpush1.msra.mxu0 %v1096
        %1162 = vmatprep.subr.mxu0 %v1099
        %1163 = vmatpush1.msra.mxu0 %v1098
        %1164 = vmatprep.subr.mxu0 %v1101
        %1165 = vmatpush1.msra.mxu0 %v1100
        %1166 = vmatprep.subr.mxu0 %v1103
        %1167 = vmatpush1.msra.mxu0 %v1102
        %1168 = vmatprep.subr.mxu0 %v1105
        %1169 = vmatpush1.msra.mxu0 %v1104
        %1170 = vmatprep.subr.mxu0 %v1107
        %1171 = vmatpush1.msra.mxu0 %v1106
        %1172 = vmatprep.subr.mxu0 %v1109
        %1173 = vmatpush1.msra.mxu0 %v1108
        %1174 = vmatprep.subr.mxu0 %v1111
        %1175 = vmatpush1.msra.mxu0 %v1110
        %1176 = vmatprep.subr.mxu0 %v1113
        %1177 = vmatpush1.msra.mxu0 %v1112
        %1178 = vmatprep.subr.mxu0 %v1115
        %1179 = vmatpush1.msra.mxu0 %v1114
        %1180 = vmatprep.subr.mxu0 %v1117
        %1181 = vmatpush1.msra.mxu0 %v1116
        %1182 = vmatprep.subr.mxu0 %v1119
        %1183 = vmatpush1.msra.mxu0 %v1118
        %1184 = vmatprep.subr.mxu0 %v1121
        %1185 = vmatpush1.msra.mxu0 %v1120
        %1186 = vmatprep.subr.mxu0 %v1123
        %1187 = vmatpush1.msra.mxu0 %v1122
        %1188 = vmatprep.subr.mxu0 %v1125
        %1189 = vmatpush1.msra.mxu0 %v1124
        %1190 = vmatprep.subr.mxu0 %v1127
        %1191 = vmatpush1.msra.mxu0 %v1126
        %1192 = vmatprep.subr.mxu0 %v1129
        %1193 = vmatpush1.msra.mxu0 %v1128
        %1194 = vmatprep.mubr.f32.mxu0 %v1065
        %1195 = vmatmul.mubr.f32.gmra.mrb[0].mxu0 %v1064
        %v1196 = vpop.f32.mrb[0].mxu0
        %v1197 = vadd.f32 0.0, %v1196
        %v1198 = vpop.f32.mrb[0].mxu0
        %v1199 = vadd.f32 0.0, %v1198
        %1200 = vdwg.mxu0
        %v1203 = vcombine.low %v1197, %v1199
        %v1205 = vadd.f32 %v368, %v1203
        %v1206 = vld [vmem:[%s7] sm:$0xf]
        %1208 = vset.pattern.permute.xlu0 0
        %1209 = vperm.xlu0 %1208, %v1206
        %v1210 = vpop.permute.xlu0 %1209
        %v1212 = vunpack.c.l.s4 839922192
        %v1213 = vunpack.c.0.s8 %v1212
        %v1214 = vlaneseq
        %v1215 = vshrl.u32 %v1214, 7
        %v1216 = vsub.s32 %v1213, %v1215
        %v1217 = vrot.slane %v1210, %v1216
        %v1219 = vadd.f32 %v1205, %v1217
        %1220 = vst [vmem:[%s367] sm:$0xff] %v1219
        %p1221 = scmp.lt.s32.totalorder %s21, 1
        %s1222 = scalar_select %p1221, %s21, 1
        %s1223 = smul.addr %s1222, 2
        %s1224 = smul.addr %s1223, 4
        %s1225 = scalar_lea.vmem %s9, %s1224
        // Predicated region
        $region61: #{ccam_dec.1} parent=55 // pred_check
          %p1226 = pneg %p238
        $region62: #{ccam_dec.1} parent=55 // pred_check_branch
          %1228 = sbr.rel (%p1226) target = $region64
        $region63: #{ccam_dec.1} parent=55 // pred_region
          _
        $region64: #{ccam_dec.1} parent=55 // pred_fallthru
          _
      $region56: #{ccam_dec.1} parent=5 // pred_fallthru
        _
      %p1229 = scmp.le.s32.totalorder 2, %s16
      // Predicated region
      $region65: #{ccam_dec.1} parent=5 // pred_check
        %p1230 = pneg %p1229
      $region66: #{ccam_dec.1} parent=5 // pred_check_branch
        %1232 = sbr.rel (%p1230) target = $region68
      $region67: #{ccam_dec.1} parent=5 // pred_region
        %s1233 = ssub.s32 %s16, 2
        // Predicated region
        $region69: #{ccam_dec.1} parent=67 // pred_check
          %p1234 = pneg %p244
        $region70: #{ccam_dec.1} parent=67 // pred_check_branch
          %1236 = sbr.rel (%p1234) target = $region72
        $region71: #{ccam_dec.1} parent=67 // pred_region
          %p1237 = scmp.lt.s32.totalorder %s22, 1
          %s1238 = scalar_select %p1237, %s22, 1
          %s1239 = smul.addr %s1238, 2
          %s1240 = smul.addr %s1239, 4
          %s1241 = scalar_lea.vmem %s9, %s1240
        $region72: #{ccam_dec.1} parent=67 // pred_fallthru
          _
      $region68: #{ccam_dec.1} parent=5 // pred_fallthru
        _
    $region6: #{ccam_dec.1} parent=1 // loop_footer
      %s20 = sadd.s32 1, %s16
    $region7: #{ccam_dec.1} parent=1 // loop_footer_branch
      %15 = sbr.rel target = $region3
    $region8: #{ccam_dec.1} parent=1 // loop_exit
      _
    %1242 = vsyncpa [#allocation3], 1
    %s1243 = scalar_lea.sflag [#allocation3], 1
    %1244 = vsyncpa %s1243, 1

</llo_original>
